<compile_context>
chip_gen: v6e
topology: v6e:2x2x1
jax: 0.10.0
libtpu: 0.0.40
codegen_flags: <defaults>
</compile_context>

<pallas_src>
import functools
import math

import jax
import jax.numpy as jnp
from jax import lax
from jax.experimental import pallas as pl
from jax.experimental.pallas import tpu as pltpu


# ----------------------------------------------------------------------------
# In-kernel helpers
# ----------------------------------------------------------------------------
def _taps(x, deltas, T):
    """x: (C, T) f32 flattened image.  Returns (9*C, T): 3x3 stride-1 taps
    stacked tap-major / channel-minor via lane rolls.  Wrap-around entries are
    zeroed by the caller with a precomputed boundary mask."""
    slabs = []
    for d in deltas:
        slabs.append(x if d == 0 else pltpu.roll(x, shift=(-d) % T, axis=1))
    return jnp.concatenate(slabs, axis=0)


def _res_encoder_block_kernel(Cout, deltas, T,
                              x_ref, m1_ref, m2_ref,
                              w1sc_ref, s1sc_ref, w2_ref, s2_ref,
                              wqkv_ref, bqkv_ref, wo_ref, bo_ref, madd_ref,
                              wd_ref, bd_ref, sel_ref,
                              att_ref, down_ref):
    f32 = jnp.float32
    x = x_ref[0]                                                    # (Cin, T) f32

    # --- BasicBlock: conv1+bn1 fused with projection shortcut (one matmul) ---
    col1 = (_taps(x, deltas, T) * m1_ref[...]).astype(jnp.bfloat16)     # (9Cin, T)
    y1 = jnp.dot(w1sc_ref[...], col1, preferred_element_type=f32) + s1sc_ref[...]
    h = jnp.maximum(y1[:Cout], 0.0)                                 # (Cout, T)
    identity = y1[Cout:]                                            # (Cout, T)

    # --- conv2 + bn2 + residual + relu ---------------------------------------
    col2 = (_taps(h, deltas, T) * m2_ref[...]).astype(jnp.bfloat16)     # (9Cout, T)
    h2 = jnp.dot(w2_ref[...], col2, preferred_element_type=f32) + s2_ref[...] + identity
    h2 = jnp.maximum(h2, 0.0)                                       # (Cout, T)

    # --- AttentionModule(1): single-head spatial self-attention --------------
    tok = h2.astype(jnp.bfloat16)                                   # (C, T)
    qkv = jnp.dot(wqkv_ref[...], tok, preferred_element_type=f32) + bqkv_ref[...]
    q = qkv[:Cout].astype(jnp.bfloat16)                             # (C, Tq)
    k = qkv[Cout:2 * Cout].astype(jnp.bfloat16)                     # (C, Tk)
    v = qkv[2 * Cout:].astype(jnp.bfloat16)                         # (C, Tk)
    # Scores as (Tk, Tq): contract the channel (sublane) axis of both operands
    # so the PV product below needs no transpose of the TxT matrix.
    s = lax.dot_general(k, q, (((0,), (0,)), ((), ())),
                        preferred_element_type=f32)                 # (Tk, Tq)
    s = s + madd_ref[0]                                             # additive key mask (Tk, 1)
    s = s - jnp.max(s, axis=0, keepdims=True)
    p = jnp.exp(s)
    p = p / jnp.sum(p, axis=0, keepdims=True)                       # exact softmax
    o = jnp.dot(v, p.astype(jnp.bfloat16), preferred_element_type=f32)      # (C, Tq)
    x_att = (jnp.dot(wo_ref[...], o.astype(jnp.bfloat16), preferred_element_type=f32)
             + bo_ref[...] + h2)                                    # residual on tokens
    att_ref[0] = x_att.astype(att_ref.dtype)

    # --- Downsample: 3x3 stride-2 conv == stride-1 conv + column selection ---
    cold = (_taps(x_att, deltas, T) * m2_ref[...]).astype(jnp.bfloat16)
    yd = jnp.dot(wd_ref[...], cold, preferred_element_type=f32) + bd_ref[...]   # (Cout, T)
    down_ref[0] = jnp.dot(yd, sel_ref[...],
                          preferred_element_type=f32).astype(down_ref.dtype)


# ----------------------------------------------------------------------------
# Host-side weight folding
# ----------------------------------------------------------------------------
def _fold_conv_bn_taps(w, b, bn_scale, bn_shift):
    """w (Cout, Cin, kh, kw) -> (Cout, kh*kw*Cin) tap-major/channel-minor with
    eval-mode BN scale folded into the rows; returns (w_folded f32, shift)."""
    Cout, Cin, kh, kw = w.shape
    wt = jnp.transpose(w, (0, 2, 3, 1)).reshape(Cout, kh * kw * Cin)
    wt = wt * bn_scale[:, None]
    shift = (bn_shift + b * bn_scale).reshape(Cout, 1)
    return wt, shift.astype(jnp.float32)


# ----------------------------------------------------------------------------
# ResEncoderBlock forward (single fused pallas_call)
# ----------------------------------------------------------------------------
def res_encoder_block(p, x, mask, stride=1, padding=1):
    """x: (B, Cin, H, W) f32; mask: (B, H*W) key mask, 1 = keep.
    Returns (x_down, resO, tranO) like the PyTorch module (resO is tranO)."""
    assert stride == 1 and padding == 1, "fused kernel assumes stride=1, padding=1"
    B, Cin, H, W = x.shape
    Cout = p["conv1_w"].shape[0]
    T = H * W
    Hd = (H + 2 - 3) // 2 + 1
    Wd = (W + 2 - 3) // 2 + 1
    Td = Hd * Wd

    # Static flattened-index offsets for the 9 taps of a 3x3 / pad-1 conv.
    deltas = tuple(di * W + dj for di in (-1, 0, 1) for dj in (-1, 0, 1))

    # Per-tap boundary masks (zero the roll wrap-around entries), repeated per
    # channel so one elementwise multiply masks the whole (9*C, T) col matrix.
    n = jnp.arange(T)
    hh, ww = n // W, n % W
    tap_ok = jnp.stack([((hh + di >= 0) & (hh + di < H) &
                         (ww + dj >= 0) & (ww + dj < W)).astype(jnp.float32)
                        for di in (-1, 0, 1) for dj in (-1, 0, 1)], axis=0)    # (9, T)
    m1 = jnp.repeat(tap_ok, Cin, axis=0)        # (9*Cin, T)
    m2 = jnp.repeat(tap_ok, Cout, axis=0)       # (9*Cout, T)

    # conv1+bn1 fused with the 1x1 projection shortcut (+bn_sc): (2Cout, 9Cin).
    w1, s1 = _fold_conv_bn_taps(p["conv1_w"], p["conv1_b"], *p["bn1"])
    sc_scale, sc_shift = p["bn_sc"]
    wsc = p["sc_w"].reshape(Cout, Cin) * sc_scale[:, None]
    wsc_taps = jnp.zeros((Cout, 9 * Cin), jnp.float32).at[:, 4 * Cin:5 * Cin].set(wsc)
    ssc = (sc_shift + p["sc_b"] * sc_scale).reshape(Cout, 1)
    w1sc = jnp.concatenate([w1, wsc_taps], axis=0).astype(jnp.bfloat16)
    s1sc = jnp.concatenate([s1, ssc], axis=0).astype(jnp.float32)

    w2, s2 = _fold_conv_bn_taps(p["conv2_w"], p["conv2_b"], *p["bn2"])
    w2 = w2.astype(jnp.bfloat16)

    ones_c = jnp.ones((Cout,), jnp.float32)
    zeros_c = jnp.zeros((Cout,), jnp.float32)
    wd, bd = _fold_conv_bn_taps(p["down_w"], p["down_b"], ones_c, zeros_c)
    wd = wd.astype(jnp.bfloat16)

    # Attention weights: fused qkv, 1/sqrt(C) folded into the q rows/bias.
    scale = 1.0 / math.sqrt(Cout)
    wqkv = jnp.concatenate([p["wq"].T * scale, p["wk"].T, p["wv"].T],
                           axis=0).astype(jnp.bfloat16)              # (3C, C)
    bqkv = jnp.concatenate([p["bq"] * scale, p["bk"], p["bv"]]
                           ).reshape(3 * Cout, 1).astype(jnp.float32)
    wo = p["wo"].T.astype(jnp.bfloat16)
    bo = p["bo"].reshape(Cout, 1).astype(jnp.float32)

    # Additive key mask (0 keep / -1e9 drop), keys on the sublane axis.
    madd = ((1.0 - mask) * -1e9).astype(jnp.float32).reshape(B, T, 1)

    # 0/1 column-selection matrix turning the stride-1 downsample into stride-2.
    src = (2 * jnp.arange(Hd)[:, None] * W + 2 * jnp.arange(Wd)[None, :]).reshape(-1)
    sel = jnp.zeros((T, Td), jnp.float32).at[src, jnp.arange(Td)].set(1.0)

    x_flat = x.reshape(B, Cin, T).astype(jnp.float32)

    fixed = lambda b: (0, 0)
    per_b3 = lambda b: (b, 0, 0)
    kernel = functools.partial(_res_encoder_block_kernel, Cout, deltas, T)

    flops = B * 2 * T * (2 * Cout * 9 * Cin + Cout * 9 * Cout + 3 * Cout * Cout
                         + 2 * Cout * T + Cout * Cout + Cout * 9 * Cout + Cout * Td)
    bytes_accessed = (4 * (x_flat.size + m1.size + m2.size + sel.size + madd.size
                           + B * Cout * (T + Td))
                      + 2 * (w1sc.size + w2.size + wd.size + wqkv.size + wo.size))

    att, down = pl.pallas_call(
        kernel,
        out_shape=(jax.ShapeDtypeStruct((B, Cout, T), jnp.float32),
                   jax.ShapeDtypeStruct((B, Cout, Td), jnp.float32)),
        grid=(B,),
        in_specs=[
            pl.BlockSpec((1, Cin, T), per_b3),           # x
            pl.BlockSpec((9 * Cin, T), fixed),           # tap mask conv1
            pl.BlockSpec((9 * Cout, T), fixed),          # tap mask conv2 / down
            pl.BlockSpec((2 * Cout, 9 * Cin), fixed),    # fused conv1+shortcut weights
            pl.BlockSpec((2 * Cout, 1), fixed),          # fused shifts
            pl.BlockSpec((Cout, 9 * Cout), fixed),       # conv2 weights
            pl.BlockSpec((Cout, 1), fixed),              # conv2 shift
            pl.BlockSpec((3 * Cout, Cout), fixed),       # qkv weights
            pl.BlockSpec((3 * Cout, 1), fixed),          # qkv bias
            pl.BlockSpec((Cout, Cout), fixed),           # out-proj weight
            pl.BlockSpec((Cout, 1), fixed),              # out-proj bias
            pl.BlockSpec((1, T, 1), per_b3),             # additive key mask
            pl.BlockSpec((Cout, 9 * Cout), fixed),       # downsample weights
            pl.BlockSpec((Cout, 1), fixed),              # downsample bias
            pl.BlockSpec((T, Td), fixed),                # stride-2 selection
        ],
        out_specs=(pl.BlockSpec((1, Cout, T), per_b3),
                   pl.BlockSpec((1, Cout, Td), per_b3)),
        compiler_params=pltpu.CompilerParams(dimension_semantics=("parallel",)),
        cost_estimate=pl.CostEstimate(flops=int(flops),
                                      transcendentals=int(B * T * T),
                                      bytes_accessed=int(bytes_accessed)),
    )(x_flat, m1, m2, w1sc, s1sc, w2, s2, wqkv, bqkv, wo, bo, madd, wd, bd, sel)

    x_att = att.reshape(B, Cout, H, W)
    x_down = down.reshape(B, Cout, Hd, Wd)
    return x_down, x_att, x_att          # resO and tranO alias the same array


# ----------------------------------------------------------------------------
# Parameters (deterministic init)
# ----------------------------------------------------------------------------
def make_bn(c, idx):
    gamma = 1.0 + 0.01 * jnp.arange(c, dtype=jnp.float32)
    beta = 0.01 * jnp.arange(c, dtype=jnp.float32) * (idx + 1)
    mean = jnp.zeros((c,), jnp.float32)
    var = jnp.ones((c,), jnp.float32)
    eps = 1e-5
    scale = gamma / jnp.sqrt(var + eps)
    shift = beta - mean * scale
    return scale, shift


def init_params(key, in_ch, out_ch, resnet_bias):
    ks = jax.random.split(key, 10)
    w = lambda k, shape: 0.1 * jax.random.normal(k, shape, jnp.float32)
    b = lambda shape: jnp.zeros(shape, jnp.float32)
    p = {}
    # BasicBlock
    p["conv1_w"] = w(ks[0], (out_ch, in_ch, 3, 3))
    p["conv1_b"] = (0.01 * jnp.arange(out_ch, dtype=jnp.float32)
                    if resnet_bias else b((out_ch,)))
    p["bn1"] = make_bn(out_ch, 0)
    p["conv2_w"] = w(ks[1], (out_ch, out_ch, 3, 3))
    p["conv2_b"] = (0.02 * jnp.arange(out_ch, dtype=jnp.float32)
                    if resnet_bias else b((out_ch,)))
    p["bn2"] = make_bn(out_ch, 1)
    p["sc_w"] = w(ks[2], (out_ch, in_ch, 1, 1))      # projection shortcut
    p["sc_b"] = b((out_ch,))
    p["bn_sc"] = make_bn(out_ch, 2)
    # AttentionModule (single head, embed dim = out_ch)
    p["wq"] = w(ks[3], (out_ch, out_ch)); p["bq"] = b((out_ch,))
    p["wk"] = w(ks[4], (out_ch, out_ch)); p["bk"] = b((out_ch,))
    p["wv"] = w(ks[5], (out_ch, out_ch)); p["bv"] = b((out_ch,))
    p["wo"] = w(ks[6], (out_ch, out_ch)); p["bo"] = b((out_ch,))
    # Downsample: 3x3 conv, stride 2, padding 1
    p["down_w"] = w(ks[7], (out_ch, out_ch, 3, 3))
    p["down_b"] = b((out_ch,))
    return p


# ----------------------------------------------------------------------------
if __name__ == "__main__":
    B, Cin, Cout, H, W = 2, 4, 8, 16, 16
    key = jax.random.PRNGKey(0)
    kx, kp = jax.random.split(key)

    x = jax.random.normal(kx, (B, Cin, H, W), jnp.float32)
    # key-side attention mask over H*W tokens: mask out the last 16 tokens
    mask = jnp.ones((B, H * W), jnp.float32).at[:, -16:].set(0.0)

    params = init_params(kp, Cin, Cout, resnet_bias=True)

    x_down, resO, tranO = res_encoder_block(params, x, mask, stride=1, padding=1)
    jax.block_until_ready((x_down, resO, tranO))

    assert x_down.shape == (B, Cout, H // 2, W // 2), x_down.shape
    assert resO.shape == (B, Cout, H, W), resO.shape
    assert tranO.shape == (B, Cout, H, W), tranO.shape
    print("KERNEL_OK")
</pallas_src>

<mosaic_0001>
module attributes {stable_mosaic.version = 11 : i64} {
  func.func @_res_encoder_block_kernel(%arg0: i32, %arg1: memref<1x4x256xf32, #tpu.memory_space<vmem>>, %arg2: memref<36x256xf32, #tpu.memory_space<vmem>>, %arg3: memref<72x256xf32, #tpu.memory_space<vmem>>, %arg4: memref<16x36xbf16, #tpu.memory_space<vmem>>, %arg5: memref<16x1xf32, #tpu.memory_space<vmem>>, %arg6: memref<8x72xbf16, #tpu.memory_space<vmem>>, %arg7: memref<8x1xf32, #tpu.memory_space<vmem>>, %arg8: memref<24x8xbf16, #tpu.memory_space<vmem>>, %arg9: memref<24x1xf32, #tpu.memory_space<vmem>>, %arg10: memref<8x8xbf16, #tpu.memory_space<vmem>>, %arg11: memref<8x1xf32, #tpu.memory_space<vmem>>, %arg12: memref<1x256x1xf32, #tpu.memory_space<vmem>>, %arg13: memref<8x72xbf16, #tpu.memory_space<vmem>>, %arg14: memref<8x1xf32, #tpu.memory_space<vmem>>, %arg15: memref<256x64xf32, #tpu.memory_space<vmem>>, %arg16: memref<1x8x256xf32, #tpu.memory_space<vmem>>, %arg17: memref<1x8x64xf32, #tpu.memory_space<vmem>>) attributes {dimension_semantics = [#tpu.dimension_semantics<parallel>], iteration_bounds = array<i64: 2>, scalar_prefetch = 0 : i64, scratch_operands = 0 : i64, tpu.core_type = #tpu.core_type<tc>, window_params = [{transform_indices = @transform_0, window_bounds = array<i64: 1, 4, 256>}, {pipeline_mode = #tpu.pipeline_mode<synchronous>, transform_indices = @transform_1, window_bounds = array<i64: 36, 256>}, {pipeline_mode = #tpu.pipeline_mode<synchronous>, transform_indices = @transform_2, window_bounds = array<i64: 72, 256>}, {pipeline_mode = #tpu.pipeline_mode<synchronous>, transform_indices = @transform_3, window_bounds = array<i64: 16, 36>}, {pipeline_mode = #tpu.pipeline_mode<synchronous>, transform_indices = @transform_4, window_bounds = array<i64: 16, 1>}, {pipeline_mode = #tpu.pipeline_mode<synchronous>, transform_indices = @transform_5, window_bounds = array<i64: 8, 72>}, {pipeline_mode = #tpu.pipeline_mode<synchronous>, transform_indices = @transform_6, window_bounds = array<i64: 8, 1>}, {pipeline_mode = #tpu.pipeline_mode<synchronous>, transform_indices = @transform_7, window_bounds = array<i64: 24, 8>}, {pipeline_mode = #tpu.pipeline_mode<synchronous>, transform_indices = @transform_8, window_bounds = array<i64: 24, 1>}, {pipeline_mode = #tpu.pipeline_mode<synchronous>, transform_indices = @transform_9, window_bounds = array<i64: 8, 8>}, {pipeline_mode = #tpu.pipeline_mode<synchronous>, transform_indices = @transform_10, window_bounds = array<i64: 8, 1>}, {transform_indices = @transform_11, window_bounds = array<i64: 1, 256, 1>}, {pipeline_mode = #tpu.pipeline_mode<synchronous>, transform_indices = @transform_12, window_bounds = array<i64: 8, 72>}, {pipeline_mode = #tpu.pipeline_mode<synchronous>, transform_indices = @transform_13, window_bounds = array<i64: 8, 1>}, {pipeline_mode = #tpu.pipeline_mode<synchronous>, transform_indices = @transform_14, window_bounds = array<i64: 256, 64>}, {transform_indices = @transform_15, window_bounds = array<i64: 1, 8, 256>}, {transform_indices = @transform_16, window_bounds = array<i64: 1, 8, 64>}]} {
    %c0 = arith.constant 0 : index
    %c0_0 = arith.constant 0 : index
    %c0_1 = arith.constant 0 : index
    %0 = vector.load %arg1[%c0, %c0_0, %c0_1] : memref<1x4x256xf32, #tpu.memory_space<vmem>>, vector<1x4x256xf32>
    %1 = vector.shape_cast %0 : vector<1x4x256xf32> to vector<4x256xf32>
    %c17_i32 = arith.constant 17 : i32
    %2 = tpu.dynamic_rotate %1 by %c17_i32 dim 1 : vector<4x256xf32>, i32 -> vector<4x256xf32>
    %c16_i32 = arith.constant 16 : i32
    %3 = tpu.dynamic_rotate %1 by %c16_i32 dim 1 : vector<4x256xf32>, i32 -> vector<4x256xf32>
    %c15_i32 = arith.constant 15 : i32
    %4 = tpu.dynamic_rotate %1 by %c15_i32 dim 1 : vector<4x256xf32>, i32 -> vector<4x256xf32>
    %c1_i32 = arith.constant 1 : i32
    %5 = tpu.dynamic_rotate %1 by %c1_i32 dim 1 : vector<4x256xf32>, i32 -> vector<4x256xf32>
    %c255_i32 = arith.constant 255 : i32
    %6 = tpu.dynamic_rotate %1 by %c255_i32 dim 1 : vector<4x256xf32>, i32 -> vector<4x256xf32>
    %c241_i32 = arith.constant 241 : i32
    %7 = tpu.dynamic_rotate %1 by %c241_i32 dim 1 : vector<4x256xf32>, i32 -> vector<4x256xf32>
    %c240_i32 = arith.constant 240 : i32
    %8 = tpu.dynamic_rotate %1 by %c240_i32 dim 1 : vector<4x256xf32>, i32 -> vector<4x256xf32>
    %c239_i32 = arith.constant 239 : i32
    %9 = tpu.dynamic_rotate %1 by %c239_i32 dim 1 : vector<4x256xf32>, i32 -> vector<4x256xf32>
    %10 = tpu.concatenate %2, %3, %4, %5, %1, %6, %7, %8, %9 in 0 : vector<4x256xf32>, vector<4x256xf32>, vector<4x256xf32>, vector<4x256xf32>, vector<4x256xf32>, vector<4x256xf32>, vector<4x256xf32>, vector<4x256xf32>, vector<4x256xf32> -> vector<36x256xf32>
    %c0_2 = arith.constant 0 : index
    %c0_3 = arith.constant 0 : index
    %11 = vector.load %arg2[%c0_2, %c0_3] : memref<36x256xf32, #tpu.memory_space<vmem>>, vector<36x256xf32>
    %12 = arith.mulf %10, %11 : vector<36x256xf32>
    %13 = arith.truncf %12 : vector<36x256xf32> to vector<36x256xbf16>
    %c0_4 = arith.constant 0 : index
    %c0_5 = arith.constant 0 : index
    %14 = vector.load %arg4[%c0_4, %c0_5] : memref<16x36xbf16, #tpu.memory_space<vmem>>, vector<16x36xbf16>
    %cst = arith.constant dense<0.000000e+00> : vector<16x256xf32>
    %15 = tpu.matmul %14, %13, %cst {dimension_numbers = #tpu.dot_dimension_numbers<[1], [0], [0], [1], [0, 0, 1, 1], [], []>} : vector<16x36xbf16>, vector<36x256xbf16>, vector<16x256xf32> -> vector<16x256xf32>
    %c0_6 = arith.constant 0 : index
    %c0_7 = arith.constant 0 : index
    %16 = vector.load %arg5[%c0_6, %c0_7] : memref<16x1xf32, #tpu.memory_space<vmem>>, vector<16x1xf32>
    %17 = vector.broadcast %16 : vector<16x1xf32> to vector<16x256xf32>
    %18 = arith.addf %15, %17 : vector<16x256xf32>
    %19 = vector.extract_strided_slice %18 {offsets = [0, 0], sizes = [8, 256], strides = [1, 1]} : vector<16x256xf32> to vector<8x256xf32>
    %cst_8 = arith.constant 0.000000e+00 : f32
    %20 = vector.broadcast %cst_8 : f32 to vector<8x256xf32>
    %21 = arith.maximumf %19, %20 : vector<8x256xf32>
    %22 = vector.extract_strided_slice %18 {offsets = [8, 0], sizes = [8, 256], strides = [1, 1]} : vector<16x256xf32> to vector<8x256xf32>
    %c17_i32_9 = arith.constant 17 : i32
    %23 = tpu.dynamic_rotate %21 by %c17_i32_9 dim 1 : vector<8x256xf32>, i32 -> vector<8x256xf32>
    %c16_i32_10 = arith.constant 16 : i32
    %24 = tpu.dynamic_rotate %21 by %c16_i32_10 dim 1 : vector<8x256xf32>, i32 -> vector<8x256xf32>
    %c15_i32_11 = arith.constant 15 : i32
    %25 = tpu.dynamic_rotate %21 by %c15_i32_11 dim 1 : vector<8x256xf32>, i32 -> vector<8x256xf32>
    %c1_i32_12 = arith.constant 1 : i32
    %26 = tpu.dynamic_rotate %21 by %c1_i32_12 dim 1 : vector<8x256xf32>, i32 -> vector<8x256xf32>
    %c255_i32_13 = arith.constant 255 : i32
    %27 = tpu.dynamic_rotate %21 by %c255_i32_13 dim 1 : vector<8x256xf32>, i32 -> vector<8x256xf32>
    %c241_i32_14 = arith.constant 241 : i32
    %28 = tpu.dynamic_rotate %21 by %c241_i32_14 dim 1 : vector<8x256xf32>, i32 -> vector<8x256xf32>
    %c240_i32_15 = arith.constant 240 : i32
    %29 = tpu.dynamic_rotate %21 by %c240_i32_15 dim 1 : vector<8x256xf32>, i32 -> vector<8x256xf32>
    %c239_i32_16 = arith.constant 239 : i32
    %30 = tpu.dynamic_rotate %21 by %c239_i32_16 dim 1 : vector<8x256xf32>, i32 -> vector<8x256xf32>
    %31 = tpu.concatenate %23, %24, %25, %26, %21, %27, %28, %29, %30 in 0 : vector<8x256xf32>, vector<8x256xf32>, vector<8x256xf32>, vector<8x256xf32>, vector<8x256xf32>, vector<8x256xf32>, vector<8x256xf32>, vector<8x256xf32>, vector<8x256xf32> -> vector<72x256xf32>
    %c0_17 = arith.constant 0 : index
    %c0_18 = arith.constant 0 : index
    %32 = vector.load %arg3[%c0_17, %c0_18] : memref<72x256xf32, #tpu.memory_space<vmem>>, vector<72x256xf32>
    %33 = arith.mulf %31, %32 : vector<72x256xf32>
    %34 = arith.truncf %33 : vector<72x256xf32> to vector<72x256xbf16>
    %c0_19 = arith.constant 0 : index
    %c0_20 = arith.constant 0 : index
    %35 = vector.load %arg6[%c0_19, %c0_20] : memref<8x72xbf16, #tpu.memory_space<vmem>>, vector<8x72xbf16>
    %cst_21 = arith.constant dense<0.000000e+00> : vector<8x256xf32>
    %36 = tpu.matmul %35, %34, %cst_21 {dimension_numbers = #tpu.dot_dimension_numbers<[1], [0], [0], [1], [0, 0, 1, 1], [], []>} : vector<8x72xbf16>, vector<72x256xbf16>, vector<8x256xf32> -> vector<8x256xf32>
    %c0_22 = arith.constant 0 : index
    %c0_23 = arith.constant 0 : index
    %37 = vector.load %arg7[%c0_22, %c0_23] : memref<8x1xf32, #tpu.memory_space<vmem>>, vector<8x1xf32>
    %38 = vector.broadcast %37 : vector<8x1xf32> to vector<8x256xf32>
    %39 = arith.addf %36, %38 : vector<8x256xf32>
    %40 = arith.addf %39, %22 : vector<8x256xf32>
    %cst_24 = arith.constant 0.000000e+00 : f32
    %41 = vector.broadcast %cst_24 : f32 to vector<8x256xf32>
    %42 = arith.maximumf %40, %41 : vector<8x256xf32>
    %43 = arith.truncf %42 : vector<8x256xf32> to vector<8x256xbf16>
    %c0_25 = arith.constant 0 : index
    %c0_26 = arith.constant 0 : index
    %44 = vector.load %arg8[%c0_25, %c0_26] : memref<24x8xbf16, #tpu.memory_space<vmem>>, vector<24x8xbf16>
    %cst_27 = arith.constant dense<0.000000e+00> : vector<24x256xf32>
    %45 = tpu.matmul %44, %43, %cst_27 {dimension_numbers = #tpu.dot_dimension_numbers<[1], [0], [0], [1], [0, 0, 1, 1], [], []>} : vector<24x8xbf16>, vector<8x256xbf16>, vector<24x256xf32> -> vector<24x256xf32>
    %c0_28 = arith.constant 0 : index
    %c0_29 = arith.constant 0 : index
    %46 = vector.load %arg9[%c0_28, %c0_29] : memref<24x1xf32, #tpu.memory_space<vmem>>, vector<24x1xf32>
    %47 = vector.broadcast %46 : vector<24x1xf32> to vector<24x256xf32>
    %48 = arith.addf %45, %47 : vector<24x256xf32>
    %49 = vector.extract_strided_slice %48 {offsets = [0, 0], sizes = [8, 256], strides = [1, 1]} : vector<24x256xf32> to vector<8x256xf32>
    %50 = arith.truncf %49 : vector<8x256xf32> to vector<8x256xbf16>
    %51 = vector.extract_strided_slice %48 {offsets = [8, 0], sizes = [8, 256], strides = [1, 1]} : vector<24x256xf32> to vector<8x256xf32>
    %52 = arith.truncf %51 : vector<8x256xf32> to vector<8x256xbf16>
    %53 = vector.extract_strided_slice %48 {offsets = [16, 0], sizes = [8, 256], strides = [1, 1]} : vector<24x256xf32> to vector<8x256xf32>
    %54 = arith.truncf %53 : vector<8x256xf32> to vector<8x256xbf16>
    %cst_30 = arith.constant dense<0.000000e+00> : vector<256x256xf32>
    %55 = tpu.matmul %52, %50, %cst_30 {dimension_numbers = #tpu.dot_dimension_numbers<[0], [0], [1], [1], [0, 1, 1, 1], [], []>} : vector<8x256xbf16>, vector<8x256xbf16>, vector<256x256xf32> -> vector<256x256xf32>
    %c0_31 = arith.constant 0 : index
    %c0_32 = arith.constant 0 : index
    %c0_33 = arith.constant 0 : index
    %56 = vector.load %arg12[%c0_31, %c0_32, %c0_33] : memref<1x256x1xf32, #tpu.memory_space<vmem>>, vector<1x256x1xf32>
    %57 = vector.shape_cast %56 : vector<1x256x1xf32> to vector<256x1xf32>
    %58 = vector.broadcast %57 : vector<256x1xf32> to vector<256x256xf32>
    %59 = arith.addf %55, %58 : vector<256x256xf32>
    %cst_34 = arith.constant dense<0xFF800000> : vector<256xf32>
    %60 = vector.multi_reduction <maximumf>, %59, %cst_34 [0] : vector<256x256xf32> to vector<256xf32>
    %61 = vector.shape_cast %60 : vector<256xf32> to vector<1x256xf32>
    %62 = vector.broadcast %61 : vector<1x256xf32> to vector<256x256xf32>
    %63 = arith.subf %59, %62 : vector<256x256xf32>
    %64 = math.exp %63 : vector<256x256xf32>
    %cst_35 = arith.constant dense<0.000000e+00> : vector<256xf32>
    %65 = vector.multi_reduction <add>, %64, %cst_35 [0] : vector<256x256xf32> to vector<256xf32>
    %66 = vector.shape_cast %65 : vector<256xf32> to vector<1x256xf32>
    %67 = vector.broadcast %66 : vector<1x256xf32> to vector<256x256xf32>
    %68 = arith.divf %64, %67 : vector<256x256xf32>
    %69 = arith.truncf %68 : vector<256x256xf32> to vector<256x256xbf16>
    %cst_36 = arith.constant dense<0.000000e+00> : vector<8x256xf32>
    %70 = tpu.matmul %54, %69, %cst_36 {dimension_numbers = #tpu.dot_dimension_numbers<[1], [0], [0], [1], [0, 0, 1, 1], [], []>} : vector<8x256xbf16>, vector<256x256xbf16>, vector<8x256xf32> -> vector<8x256xf32>
    %c0_37 = arith.constant 0 : index
    %c0_38 = arith.constant 0 : index
    %71 = vector.load %arg10[%c0_37, %c0_38] : memref<8x8xbf16, #tpu.memory_space<vmem>>, vector<8x8xbf16>
    %72 = arith.truncf %70 : vector<8x256xf32> to vector<8x256xbf16>
    %cst_39 = arith.constant dense<0.000000e+00> : vector<8x256xf32>
    %73 = tpu.matmul %71, %72, %cst_39 {dimension_numbers = #tpu.dot_dimension_numbers<[1], [0], [0], [1], [0, 0, 1, 1], [], []>} : vector<8x8xbf16>, vector<8x256xbf16>, vector<8x256xf32> -> vector<8x256xf32>
    %c0_40 = arith.constant 0 : index
    %c0_41 = arith.constant 0 : index
    %74 = vector.load %arg11[%c0_40, %c0_41] : memref<8x1xf32, #tpu.memory_space<vmem>>, vector<8x1xf32>
    %75 = vector.broadcast %74 : vector<8x1xf32> to vector<8x256xf32>
    %76 = arith.addf %73, %75 : vector<8x256xf32>
    %77 = arith.addf %76, %42 : vector<8x256xf32>
    %c0_42 = arith.constant 0 : index
    %c0_43 = arith.constant 0 : index
    %c0_44 = arith.constant 0 : index
    %78 = vector.load %arg16[%c0_42, %c0_43, %c0_44] : memref<1x8x256xf32, #tpu.memory_space<vmem>>, vector<1x8x256xf32>
    %79 = vector.shape_cast %78 : vector<1x8x256xf32> to vector<8x256xf32>
    %80 = vector.shape_cast %77 : vector<8x256xf32> to vector<1x8x256xf32>
    tpu.vector_store %arg16[%c0_42, %c0_43, %c0_44], %80 {strides = array<i32>} : memref<1x8x256xf32, #tpu.memory_space<vmem>>, vector<1x8x256xf32>,
    %c17_i32_45 = arith.constant 17 : i32
    %81 = tpu.dynamic_rotate %77 by %c17_i32_45 dim 1 : vector<8x256xf32>, i32 -> vector<8x256xf32>
    %c16_i32_46 = arith.constant 16 : i32
    %82 = tpu.dynamic_rotate %77 by %c16_i32_46 dim 1 : vector<8x256xf32>, i32 -> vector<8x256xf32>
    %c15_i32_47 = arith.constant 15 : i32
    %83 = tpu.dynamic_rotate %77 by %c15_i32_47 dim 1 : vector<8x256xf32>, i32 -> vector<8x256xf32>
    %c1_i32_48 = arith.constant 1 : i32
    %84 = tpu.dynamic_rotate %77 by %c1_i32_48 dim 1 : vector<8x256xf32>, i32 -> vector<8x256xf32>
    %c255_i32_49 = arith.constant 255 : i32
    %85 = tpu.dynamic_rotate %77 by %c255_i32_49 dim 1 : vector<8x256xf32>, i32 -> vector<8x256xf32>
    %c241_i32_50 = arith.constant 241 : i32
    %86 = tpu.dynamic_rotate %77 by %c241_i32_50 dim 1 : vector<8x256xf32>, i32 -> vector<8x256xf32>
    %c240_i32_51 = arith.constant 240 : i32
    %87 = tpu.dynamic_rotate %77 by %c240_i32_51 dim 1 : vector<8x256xf32>, i32 -> vector<8x256xf32>
    %c239_i32_52 = arith.constant 239 : i32
    %88 = tpu.dynamic_rotate %77 by %c239_i32_52 dim 1 : vector<8x256xf32>, i32 -> vector<8x256xf32>
    %89 = tpu.concatenate %81, %82, %83, %84, %77, %85, %86, %87, %88 in 0 : vector<8x256xf32>, vector<8x256xf32>, vector<8x256xf32>, vector<8x256xf32>, vector<8x256xf32>, vector<8x256xf32>, vector<8x256xf32>, vector<8x256xf32>, vector<8x256xf32> -> vector<72x256xf32>
    %c0_53 = arith.constant 0 : index
    %c0_54 = arith.constant 0 : index
    %90 = vector.load %arg3[%c0_53, %c0_54] : memref<72x256xf32, #tpu.memory_space<vmem>>, vector<72x256xf32>
    %91 = arith.mulf %89, %90 : vector<72x256xf32>
    %92 = arith.truncf %91 : vector<72x256xf32> to vector<72x256xbf16>
    %c0_55 = arith.constant 0 : index
    %c0_56 = arith.constant 0 : index
    %93 = vector.load %arg13[%c0_55, %c0_56] : memref<8x72xbf16, #tpu.memory_space<vmem>>, vector<8x72xbf16>
    %cst_57 = arith.constant dense<0.000000e+00> : vector<8x256xf32>
    %94 = tpu.matmul %93, %92, %cst_57 {dimension_numbers = #tpu.dot_dimension_numbers<[1], [0], [0], [1], [0, 0, 1, 1], [], []>} : vector<8x72xbf16>, vector<72x256xbf16>, vector<8x256xf32> -> vector<8x256xf32>
    %c0_58 = arith.constant 0 : index
    %c0_59 = arith.constant 0 : index
    %95 = vector.load %arg14[%c0_58, %c0_59] : memref<8x1xf32, #tpu.memory_space<vmem>>, vector<8x1xf32>
    %96 = vector.broadcast %95 : vector<8x1xf32> to vector<8x256xf32>
    %97 = arith.addf %94, %96 : vector<8x256xf32>
    %c0_60 = arith.constant 0 : index
    %c0_61 = arith.constant 0 : index
    %98 = vector.load %arg15[%c0_60, %c0_61] : memref<256x64xf32, #tpu.memory_space<vmem>>, vector<256x64xf32>
    %cst_62 = arith.constant dense<0.000000e+00> : vector<8x64xf32>
    %99 = tpu.matmul %97, %98, %cst_62 {dimension_numbers = #tpu.dot_dimension_numbers<[1], [0], [0], [1], [0, 0, 1, 1], [], []>} : vector<8x256xf32>, vector<256x64xf32>, vector<8x64xf32> -> vector<8x64xf32>
    %c0_63 = arith.constant 0 : index
    %c0_64 = arith.constant 0 : index
    %c0_65 = arith.constant 0 : index
    %100 = vector.load %arg17[%c0_63, %c0_64, %c0_65] : memref<1x8x64xf32, #tpu.memory_space<vmem>>, vector<1x8x64xf32>
    %101 = vector.shape_cast %100 : vector<1x8x64xf32> to vector<8x64xf32>
    %102 = vector.shape_cast %99 : vector<8x64xf32> to vector<1x8x64xf32>
    tpu.vector_store %arg17[%c0_63, %c0_64, %c0_65], %102 {strides = array<i32>} : memref<1x8x64xf32, #tpu.memory_space<vmem>>, vector<1x8x64xf32>,
    return
  }
  func.func @transform_0(%arg0: i32) -> (i32, i32, i32) {
    %c0_i32 = arith.constant 0 : i32
    %c0_i32_0 = arith.constant 0 : i32
    %c0_i32_1 = arith.constant 0 : i32
    return %arg0, %c0_i32, %c0_i32_0 : i32, i32, i32
  }
  func.func @transform_1(%arg0: i32) -> (i32, i32) {
    %c0_i32 = arith.constant 0 : i32
    %c0_i32_0 = arith.constant 0 : i32
    %c0_i32_1 = arith.constant 0 : i32
    return %c0_i32, %c0_i32_0 : i32, i32
  }
  func.func @transform_2(%arg0: i32) -> (i32, i32) {
    %c0_i32 = arith.constant 0 : i32
    %c0_i32_0 = arith.constant 0 : i32
    %c0_i32_1 = arith.constant 0 : i32
    return %c0_i32, %c0_i32_0 : i32, i32
  }
  func.func @transform_3(%arg0: i32) -> (i32, i32) {
    %c0_i32 = arith.constant 0 : i32
    %c0_i32_0 = arith.constant 0 : i32
    %c0_i32_1 = arith.constant 0 : i32
    return %c0_i32, %c0_i32_0 : i32, i32
  }
  func.func @transform_4(%arg0: i32) -> (i32, i32) {
    %c0_i32 = arith.constant 0 : i32
    %c0_i32_0 = arith.constant 0 : i32
    %c0_i32_1 = arith.constant 0 : i32
    return %c0_i32, %c0_i32_0 : i32, i32
  }
  func.func @transform_5(%arg0: i32) -> (i32, i32) {
    %c0_i32 = arith.constant 0 : i32
    %c0_i32_0 = arith.constant 0 : i32
    %c0_i32_1 = arith.constant 0 : i32
    return %c0_i32, %c0_i32_0 : i32, i32
  }
  func.func @transform_6(%arg0: i32) -> (i32, i32) {
    %c0_i32 = arith.constant 0 : i32
    %c0_i32_0 = arith.constant 0 : i32
    %c0_i32_1 = arith.constant 0 : i32
    return %c0_i32, %c0_i32_0 : i32, i32
  }
  func.func @transform_7(%arg0: i32) -> (i32, i32) {
    %c0_i32 = arith.constant 0 : i32
    %c0_i32_0 = arith.constant 0 : i32
    %c0_i32_1 = arith.constant 0 : i32
    return %c0_i32, %c0_i32_0 : i32, i32
  }
  func.func @transform_8(%arg0: i32) -> (i32, i32) {
    %c0_i32 = arith.constant 0 : i32
    %c0_i32_0 = arith.constant 0 : i32
    %c0_i32_1 = arith.constant 0 : i32
    return %c0_i32, %c0_i32_0 : i32, i32
  }
  func.func @transform_9(%arg0: i32) -> (i32, i32) {
    %c0_i32 = arith.constant 0 : i32
    %c0_i32_0 = arith.constant 0 : i32
    %c0_i32_1 = arith.constant 0 : i32
    return %c0_i32, %c0_i32_0 : i32, i32
  }
  func.func @transform_10(%arg0: i32) -> (i32, i32) {
    %c0_i32 = arith.constant 0 : i32
    %c0_i32_0 = arith.constant 0 : i32
    %c0_i32_1 = arith.constant 0 : i32
    return %c0_i32, %c0_i32_0 : i32, i32
  }
  func.func @transform_11(%arg0: i32) -> (i32, i32, i32) {
    %c0_i32 = arith.constant 0 : i32
    %c0_i32_0 = arith.constant 0 : i32
    %c0_i32_1 = arith.constant 0 : i32
    return %arg0, %c0_i32, %c0_i32_0 : i32, i32, i32
  }
  func.func @transform_12(%arg0: i32) -> (i32, i32) {
    %c0_i32 = arith.constant 0 : i32
    %c0_i32_0 = arith.constant 0 : i32
    %c0_i32_1 = arith.constant 0 : i32
    return %c0_i32, %c0_i32_0 : i32, i32
  }
  func.func @transform_13(%arg0: i32) -> (i32, i32) {
    %c0_i32 = arith.constant 0 : i32
    %c0_i32_0 = arith.constant 0 : i32
    %c0_i32_1 = arith.constant 0 : i32
    return %c0_i32, %c0_i32_0 : i32, i32
  }
  func.func @transform_14(%arg0: i32) -> (i32, i32) {
    %c0_i32 = arith.constant 0 : i32
    %c0_i32_0 = arith.constant 0 : i32
    %c0_i32_1 = arith.constant 0 : i32
    return %c0_i32, %c0_i32_0 : i32, i32
  }
  func.func @transform_15(%arg0: i32) -> (i32, i32, i32) {
    %c0_i32 = arith.constant 0 : i32
    %c0_i32_0 = arith.constant 0 : i32
    %c0_i32_1 = arith.constant 0 : i32
    return %arg0, %c0_i32, %c0_i32_0 : i32, i32, i32
  }
  func.func @transform_16(%arg0: i32) -> (i32, i32, i32) {
    %c0_i32 = arith.constant 0 : i32
    %c0_i32_0 = arith.constant 0 : i32
    %c0_i32_1 = arith.constant 0 : i32
    return %arg0, %c0_i32, %c0_i32_0 : i32, i32, i32
  }
}

</mosaic_0001>

<llo_original>
// kernel: tpu_custom_call.1
$region0: #{tpu_custom_call.1}
  #allocation0 [shape = 'u32[]', space=smem, size = 0x4, offset = 0x4, fixed_abs, tag = 'smem constant byte address 0x4 - core index']
  #allocation1 [shape = 'u32[144,128]{1,0:T(1,128)}', space=vmem, size = 0x12000, scoped, tag = 'internal scratch']
  %s0 = inlined_call_operand.vmem [shape: f32[2,4,256], index: 0, kind: input, shape index: {}]
  %s1 = inlined_call_operand.vmem [shape: f32[36,256], index: 1, kind: input, shape index: {}]
  %s2 = inlined_call_operand.vmem [shape: f32[72,256], index: 2, kind: input, shape index: {}]
  %s3 = inlined_call_operand.vmem [shape: bf16[16,36], index: 3, kind: input, shape index: {}]
  %s4 = inlined_call_operand.vmem [shape: f32[16,1], index: 4, kind: input, shape index: {}]
  %s5 = inlined_call_operand.vmem [shape: bf16[8,72], index: 5, kind: input, shape index: {}]
  %s6 = inlined_call_operand.vmem [shape: f32[8,1], index: 6, kind: input, shape index: {}]
  %s7 = inlined_call_operand.vmem [shape: bf16[24,8], index: 7, kind: input, shape index: {}]
  %s8 = inlined_call_operand.vmem [shape: f32[24,1], index: 8, kind: input, shape index: {}]
  %s9 = inlined_call_operand.vmem [shape: bf16[8,8], index: 9, kind: input, shape index: {}]
  %s10 = inlined_call_operand.vmem [shape: f32[8,1], index: 10, kind: input, shape index: {}]
  %s11 = inlined_call_operand.vmem [shape: f32[2,256,1], index: 11, kind: input, shape index: {}]
  %s12 = inlined_call_operand.vmem [shape: bf16[8,72], index: 12, kind: input, shape index: {}]
  %s13 = inlined_call_operand.vmem [shape: f32[8,1], index: 13, kind: input, shape index: {}]
  %s14 = inlined_call_operand.vmem [shape: f32[256,64], index: 14, kind: input, shape index: {}]
  %s15 = inlined_call_operand.hbm [shape: f32[2,8,256], index: 15, kind: output, shape index: {0}]
  %s16 = inlined_call_operand.hbm [shape: f32[2,8,64], index: 16, kind: output, shape index: {1}]
  %17 = xla_tuple %s15, %s16
  %s18 = sld [smem:[#allocation0]]
  $region101: #{tpu_custom_call.1} parent=0
    _
  %s20 = ssub.s32 1, %s18
  %s21 = scalar_select 0, %s20, %s18
  $region1: #{tpu_custom_call.1} parent=0
    #allocation2 [shape = 'u8[16384]{0}', space=vmem, size = 0x4000, scoped, tag = 'output window, operand 0']
    #allocation3 [shape = 's32[2]{0}', space=sflag, size = 0x8, scoped, tag = 'scoped memory for tpu_custom_call.1']
    #allocation4 [shape = 'u8[8192]{0}', space=vmem, size = 0x2000, scoped, tag = 'output window, operand 1']
    #allocation5 [shape = 's32[2]{0}', space=sflag, size = 0x8, scoped, tag = 'scoped memory for tpu_custom_call.1']
    %22 = vsyncpa [#allocation3], 0
    %s23 = scalar_lea.sflag [#allocation3], 1
    %24 = vsyncpa %s23, 0
    %25 = vsyncpa [#allocation5], 0
    %s26 = scalar_lea.sflag [#allocation5], 1
    %27 = vsyncpa %s26, 0
    loop: start=0, step=1, limit=4
    $region2: #{tpu_custom_call.1} parent=1 // loop_pre_header
      _
    $region3: #{tpu_custom_call.1} parent=1 // loop_header
      %s29 = sphi 0, %s33
      %p30 = scmp.ge.s32.totalorder %s29, 4
      %s39 = sphi 0, %s41
      %s42 = sphi 0, %s39
      %s43 = sphi 0, %s42
      %s59 = sphi 0, %s43
      %s63 = sphi 0, %s63
      %s65 = sphi 0, %s63
      %s66 = sphi 0, %s65
      %s80 = sphi 0, %s66
      %s84 = sphi 0, %s84
      %s86 = sphi 0, %s84
      %s87 = sphi 0, %s86
      %s101 = sphi 0, %s87
      %s105 = sphi 0, %s105
      %s107 = sphi 0, %s105
      %s108 = sphi 0, %s107
      %s122 = sphi 0, %s108
      %s126 = sphi 0, %s126
      %s128 = sphi 0, %s126
      %s129 = sphi 0, %s128
      %s143 = sphi 0, %s129
      %s147 = sphi 0, %s147
      %s149 = sphi 0, %s147
      %s150 = sphi 0, %s149
      %s164 = sphi 0, %s150
      %s168 = sphi 0, %s168
      %s170 = sphi 0, %s168
      %s171 = sphi 0, %s170
      %s185 = sphi 0, %s171
      %s189 = sphi 0, %s189
      %s191 = sphi 0, %s189
      %s192 = sphi 0, %s191
      %s206 = sphi 0, %s192
      %s210 = sphi 0, %s210
      %s212 = sphi 0, %s210
      %s213 = sphi 0, %s212
      %s227 = sphi 0, %s213
      %s231 = sphi 0, %s231
      %s233 = sphi 0, %s231
      %s234 = sphi 0, %s233
      %s248 = sphi 0, %s234
      %s252 = sphi 0, %s252
      %s254 = sphi 0, %s252
      %s255 = sphi 0, %s254
      %s269 = sphi 0, %s255
      %s275 = sphi 0, %s277
      %s278 = sphi 0, %s275
      %s279 = sphi 0, %s278
      %s295 = sphi 0, %s279
      %s299 = sphi 0, %s299
      %s301 = sphi 0, %s299
      %s302 = sphi 0, %s301
      %s316 = sphi 0, %s302
      %s320 = sphi 0, %s320
      %s322 = sphi 0, %s320
      %s323 = sphi 0, %s322
      %s337 = sphi 0, %s323
      %s341 = sphi 0, %s341
      %s343 = sphi 0, %s341
      %s344 = sphi 0, %s343
      %s358 = sphi 0, %s344
      %s364 = sphi 0, %s366
      %s367 = sphi 0, %s364
      %s368 = sphi 0, %s367
      %s384 = sphi 0, %s368
      %s390 = sphi 0, %s392
      %s393 = sphi 0, %s390
      %s394 = sphi 0, %s393
      %s410 = sphi 0, %s394
    $region4: #{tpu_custom_call.1} parent=1 // loop_header_branch
      %32 = sbr.rel (%p30) target = $region8
    $region5: #{tpu_custom_call.1} parent=1 // loop_body
      %s34 = ssub.s32 %s29, 1
      %s35 = ssub.s32 %s29, 2
      %s36 = sadd.s32 %s29, 1
      %s37 = ssub.s32 %s29, %s36
      %p38 = scmp.eq.s32.totalorder %s37, 0
      %s40 = sadd.s32 %s39, 1
      %s41 = scalar_select %p38, %s39, %s40
      %p44 = pneg %p38
      %p45 = scmp.eq.s32.totalorder %s29, 1
      %p46 = por %p44, %p45
      %p47 = scmp.ne.s32.totalorder %s39, %s42
      %p48 = scmp.eq.s32.totalorder %s29, 0
      %p49 = por %p47, %p48
      %p50 = scmp.ne.s32.totalorder %s39, %s42
      %p51 = scmp.eq.s32.totalorder %s34, 1
      %p52 = por %p50, %p51
      %p53 = scmp.ne.s32.totalorder %s42, %s43
      %p54 = scmp.eq.s32.totalorder %s34, 0
      %p55 = por %p53, %p54
      %p56 = scmp.ne.s32.totalorder %s42, %s43
      %p57 = scmp.eq.s32.totalorder %s35, 1
      %p58 = por %p56, %p57
      %p60 = scmp.ne.s32.totalorder %s43, %s59
      %p61 = scmp.eq.s32.totalorder %s35, 0
      %p62 = por %p60, %p61
      %s64 = sadd.s32 %s63, 1
      %p67 = scmp.eq.s32.totalorder %s29, 1
      %p68 = scmp.ne.s32.totalorder %s63, %s65
      %p69 = scmp.eq.s32.totalorder %s29, 0
      %p70 = por %p68, %p69
      %p71 = scmp.ne.s32.totalorder %s63, %s65
      %p72 = scmp.eq.s32.totalorder %s34, 1
      %p73 = por %p71, %p72
      %p74 = scmp.ne.s32.totalorder %s65, %s66
      %p75 = scmp.eq.s32.totalorder %s34, 0
      %p76 = por %p74, %p75
      %p77 = scmp.ne.s32.totalorder %s65, %s66
      %p78 = scmp.eq.s32.totalorder %s35, 1
      %p79 = por %p77, %p78
      %p81 = scmp.ne.s32.totalorder %s66, %s80
      %p82 = scmp.eq.s32.totalorder %s35, 0
      %p83 = por %p81, %p82
      %s85 = sadd.s32 %s84, 1
      %p88 = scmp.eq.s32.totalorder %s29, 1
      %p89 = scmp.ne.s32.totalorder %s84, %s86
      %p90 = scmp.eq.s32.totalorder %s29, 0
      %p91 = por %p89, %p90
      %p92 = scmp.ne.s32.totalorder %s84, %s86
      %p93 = scmp.eq.s32.totalorder %s34, 1
      %p94 = por %p92, %p93
      %p95 = scmp.ne.s32.totalorder %s86, %s87
      %p96 = scmp.eq.s32.totalorder %s34, 0
      %p97 = por %p95, %p96
      %p98 = scmp.ne.s32.totalorder %s86, %s87
      %p99 = scmp.eq.s32.totalorder %s35, 1
      %p100 = por %p98, %p99
      %p102 = scmp.ne.s32.totalorder %s87, %s101
      %p103 = scmp.eq.s32.totalorder %s35, 0
      %p104 = por %p102, %p103
      %s106 = sadd.s32 %s105, 1
      %p109 = scmp.eq.s32.totalorder %s29, 1
      %p110 = scmp.ne.s32.totalorder %s105, %s107
      %p111 = scmp.eq.s32.totalorder %s29, 0
      %p112 = por %p110, %p111
      %p113 = scmp.ne.s32.totalorder %s105, %s107
      %p114 = scmp.eq.s32.totalorder %s34, 1
      %p115 = por %p113, %p114
      %p116 = scmp.ne.s32.totalorder %s107, %s108
      %p117 = scmp.eq.s32.totalorder %s34, 0
      %p118 = por %p116, %p117
      %p119 = scmp.ne.s32.totalorder %s107, %s108
      %p120 = scmp.eq.s32.totalorder %s35, 1
      %p121 = por %p119, %p120
      %p123 = scmp.ne.s32.totalorder %s108, %s122
      %p124 = scmp.eq.s32.totalorder %s35, 0
      %p125 = por %p123, %p124
      %s127 = sadd.s32 %s126, 1
      %p130 = scmp.eq.s32.totalorder %s29, 1
      %p131 = scmp.ne.s32.totalorder %s126, %s128
      %p132 = scmp.eq.s32.totalorder %s29, 0
      %p133 = por %p131, %p132
      %p134 = scmp.ne.s32.totalorder %s126, %s128
      %p135 = scmp.eq.s32.totalorder %s34, 1
      %p136 = por %p134, %p135
      %p137 = scmp.ne.s32.totalorder %s128, %s129
      %p138 = scmp.eq.s32.totalorder %s34, 0
      %p139 = por %p137, %p138
      %p140 = scmp.ne.s32.totalorder %s128, %s129
      %p141 = scmp.eq.s32.totalorder %s35, 1
      %p142 = por %p140, %p141
      %p144 = scmp.ne.s32.totalorder %s129, %s143
      %p145 = scmp.eq.s32.totalorder %s35, 0
      %p146 = por %p144, %p145
      %s148 = sadd.s32 %s147, 1
      %p151 = scmp.eq.s32.totalorder %s29, 1
      %p152 = scmp.ne.s32.totalorder %s147, %s149
      %p153 = scmp.eq.s32.totalorder %s29, 0
      %p154 = por %p152, %p153
      %p155 = scmp.ne.s32.totalorder %s147, %s149
      %p156 = scmp.eq.s32.totalorder %s34, 1
      %p157 = por %p155, %p156
      %p158 = scmp.ne.s32.totalorder %s149, %s150
      %p159 = scmp.eq.s32.totalorder %s34, 0
      %p160 = por %p158, %p159
      %p161 = scmp.ne.s32.totalorder %s149, %s150
      %p162 = scmp.eq.s32.totalorder %s35, 1
      %p163 = por %p161, %p162
      %p165 = scmp.ne.s32.totalorder %s150, %s164
      %p166 = scmp.eq.s32.totalorder %s35, 0
      %p167 = por %p165, %p166
      %s169 = sadd.s32 %s168, 1
      %p172 = scmp.eq.s32.totalorder %s29, 1
      %p173 = scmp.ne.s32.totalorder %s168, %s170
      %p174 = scmp.eq.s32.totalorder %s29, 0
      %p175 = por %p173, %p174
      %p176 = scmp.ne.s32.totalorder %s168, %s170
      %p177 = scmp.eq.s32.totalorder %s34, 1
      %p178 = por %p176, %p177
      %p179 = scmp.ne.s32.totalorder %s170, %s171
      %p180 = scmp.eq.s32.totalorder %s34, 0
      %p181 = por %p179, %p180
      %p182 = scmp.ne.s32.totalorder %s170, %s171
      %p183 = scmp.eq.s32.totalorder %s35, 1
      %p184 = por %p182, %p183
      %p186 = scmp.ne.s32.totalorder %s171, %s185
      %p187 = scmp.eq.s32.totalorder %s35, 0
      %p188 = por %p186, %p187
      %s190 = sadd.s32 %s189, 1
      %p193 = scmp.eq.s32.totalorder %s29, 1
      %p194 = scmp.ne.s32.totalorder %s189, %s191
      %p195 = scmp.eq.s32.totalorder %s29, 0
      %p196 = por %p194, %p195
      %p197 = scmp.ne.s32.totalorder %s189, %s191
      %p198 = scmp.eq.s32.totalorder %s34, 1
      %p199 = por %p197, %p198
      %p200 = scmp.ne.s32.totalorder %s191, %s192
      %p201 = scmp.eq.s32.totalorder %s34, 0
      %p202 = por %p200, %p201
      %p203 = scmp.ne.s32.totalorder %s191, %s192
      %p204 = scmp.eq.s32.totalorder %s35, 1
      %p205 = por %p203, %p204
      %p207 = scmp.ne.s32.totalorder %s192, %s206
      %p208 = scmp.eq.s32.totalorder %s35, 0
      %p209 = por %p207, %p208
      %s211 = sadd.s32 %s210, 1
      %p214 = scmp.eq.s32.totalorder %s29, 1
      %p215 = scmp.ne.s32.totalorder %s210, %s212
      %p216 = scmp.eq.s32.totalorder %s29, 0
      %p217 = por %p215, %p216
      %p218 = scmp.ne.s32.totalorder %s210, %s212
      %p219 = scmp.eq.s32.totalorder %s34, 1
      %p220 = por %p218, %p219
      %p221 = scmp.ne.s32.totalorder %s212, %s213
      %p222 = scmp.eq.s32.totalorder %s34, 0
      %p223 = por %p221, %p222
      %p224 = scmp.ne.s32.totalorder %s212, %s213
      %p225 = scmp.eq.s32.totalorder %s35, 1
      %p226 = por %p224, %p225
      %p228 = scmp.ne.s32.totalorder %s213, %s227
      %p229 = scmp.eq.s32.totalorder %s35, 0
      %p230 = por %p228, %p229
      %s232 = sadd.s32 %s231, 1
      %p235 = scmp.eq.s32.totalorder %s29, 1
      %p236 = scmp.ne.s32.totalorder %s231, %s233
      %p237 = scmp.eq.s32.totalorder %s29, 0
      %p238 = por %p236, %p237
      %p239 = scmp.ne.s32.totalorder %s231, %s233
      %p240 = scmp.eq.s32.totalorder %s34, 1
      %p241 = por %p239, %p240
      %p242 = scmp.ne.s32.totalorder %s233, %s234
      %p243 = scmp.eq.s32.totalorder %s34, 0
      %p244 = por %p242, %p243
      %p245 = scmp.ne.s32.totalorder %s233, %s234
      %p246 = scmp.eq.s32.totalorder %s35, 1
      %p247 = por %p245, %p246
      %p249 = scmp.ne.s32.totalorder %s234, %s248
      %p250 = scmp.eq.s32.totalorder %s35, 0
      %p251 = por %p249, %p250
      %s253 = sadd.s32 %s252, 1
      %p256 = scmp.eq.s32.totalorder %s29, 1
      %p257 = scmp.ne.s32.totalorder %s252, %s254
      %p258 = scmp.eq.s32.totalorder %s29, 0
      %p259 = por %p257, %p258
      %p260 = scmp.ne.s32.totalorder %s252, %s254
      %p261 = scmp.eq.s32.totalorder %s34, 1
      %p262 = por %p260, %p261
      %p263 = scmp.ne.s32.totalorder %s254, %s255
      %p264 = scmp.eq.s32.totalorder %s34, 0
      %p265 = por %p263, %p264
      %p266 = scmp.ne.s32.totalorder %s254, %s255
      %p267 = scmp.eq.s32.totalorder %s35, 1
      %p268 = por %p266, %p267
      %p270 = scmp.ne.s32.totalorder %s255, %s269
      %p271 = scmp.eq.s32.totalorder %s35, 0
      %p272 = por %p270, %p271
      %s273 = ssub.s32 %s29, %s36
      %p274 = scmp.eq.s32.totalorder %s273, 0
      %s276 = sadd.s32 %s275, 1
      %s277 = scalar_select %p274, %s275, %s276
      %p280 = pneg %p274
      %p281 = scmp.eq.s32.totalorder %s29, 1
      %p282 = por %p280, %p281
      %p283 = scmp.ne.s32.totalorder %s275, %s278
      %p284 = scmp.eq.s32.totalorder %s29, 0
      %p285 = por %p283, %p284
      %p286 = scmp.ne.s32.totalorder %s275, %s278
      %p287 = scmp.eq.s32.totalorder %s34, 1
      %p288 = por %p286, %p287
      %p289 = scmp.ne.s32.totalorder %s278, %s279
      %p290 = scmp.eq.s32.totalorder %s34, 0
      %p291 = por %p289, %p290
      %p292 = scmp.ne.s32.totalorder %s278, %s279
      %p293 = scmp.eq.s32.totalorder %s35, 1
      %p294 = por %p292, %p293
      %p296 = scmp.ne.s32.totalorder %s279, %s295
      %p297 = scmp.eq.s32.totalorder %s35, 0
      %p298 = por %p296, %p297
      %s300 = sadd.s32 %s299, 1
      %p303 = scmp.eq.s32.totalorder %s29, 1
      %p304 = scmp.ne.s32.totalorder %s299, %s301
      %p305 = scmp.eq.s32.totalorder %s29, 0
      %p306 = por %p304, %p305
      %p307 = scmp.ne.s32.totalorder %s299, %s301
      %p308 = scmp.eq.s32.totalorder %s34, 1
      %p309 = por %p307, %p308
      %p310 = scmp.ne.s32.totalorder %s301, %s302
      %p311 = scmp.eq.s32.totalorder %s34, 0
      %p312 = por %p310, %p311
      %p313 = scmp.ne.s32.totalorder %s301, %s302
      %p314 = scmp.eq.s32.totalorder %s35, 1
      %p315 = por %p313, %p314
      %p317 = scmp.ne.s32.totalorder %s302, %s316
      %p318 = scmp.eq.s32.totalorder %s35, 0
      %p319 = por %p317, %p318
      %s321 = sadd.s32 %s320, 1
      %p324 = scmp.eq.s32.totalorder %s29, 1
      %p325 = scmp.ne.s32.totalorder %s320, %s322
      %p326 = scmp.eq.s32.totalorder %s29, 0
      %p327 = por %p325, %p326
      %p328 = scmp.ne.s32.totalorder %s320, %s322
      %p329 = scmp.eq.s32.totalorder %s34, 1
      %p330 = por %p328, %p329
      %p331 = scmp.ne.s32.totalorder %s322, %s323
      %p332 = scmp.eq.s32.totalorder %s34, 0
      %p333 = por %p331, %p332
      %p334 = scmp.ne.s32.totalorder %s322, %s323
      %p335 = scmp.eq.s32.totalorder %s35, 1
      %p336 = por %p334, %p335
      %p338 = scmp.ne.s32.totalorder %s323, %s337
      %p339 = scmp.eq.s32.totalorder %s35, 0
      %p340 = por %p338, %p339
      %s342 = sadd.s32 %s341, 1
      %p345 = scmp.eq.s32.totalorder %s29, 1
      %p346 = scmp.ne.s32.totalorder %s341, %s343
      %p347 = scmp.eq.s32.totalorder %s29, 0
      %p348 = por %p346, %p347
      %p349 = scmp.ne.s32.totalorder %s341, %s343
      %p350 = scmp.eq.s32.totalorder %s34, 1
      %p351 = por %p349, %p350
      %p352 = scmp.ne.s32.totalorder %s343, %s344
      %p353 = scmp.eq.s32.totalorder %s34, 0
      %p354 = por %p352, %p353
      %p355 = scmp.ne.s32.totalorder %s343, %s344
      %p356 = scmp.eq.s32.totalorder %s35, 1
      %p357 = por %p355, %p356
      %p359 = scmp.ne.s32.totalorder %s344, %s358
      %p360 = scmp.eq.s32.totalorder %s35, 0
      %p361 = por %p359, %p360
      %s362 = ssub.s32 %s29, %s36
      %p363 = scmp.eq.s32.totalorder %s362, 0
      %s365 = sadd.s32 %s364, 1
      %s366 = scalar_select %p363, %s364, %s365
      %p369 = pneg %p363
      %p370 = scmp.eq.s32.totalorder %s29, 1
      %p371 = por %p369, %p370
      %p372 = scmp.ne.s32.totalorder %s364, %s367
      %p373 = scmp.eq.s32.totalorder %s29, 0
      %p374 = por %p372, %p373
      %p375 = scmp.ne.s32.totalorder %s364, %s367
      %p376 = scmp.eq.s32.totalorder %s34, 1
      %p377 = por %p375, %p376
      %p378 = scmp.ne.s32.totalorder %s367, %s368
      %p379 = scmp.eq.s32.totalorder %s34, 0
      %p380 = por %p378, %p379
      %p381 = scmp.ne.s32.totalorder %s367, %s368
      %p382 = scmp.eq.s32.totalorder %s35, 1
      %p383 = por %p381, %p382
      %p385 = scmp.ne.s32.totalorder %s368, %s384
      %p386 = scmp.eq.s32.totalorder %s35, 0
      %p387 = por %p385, %p386
      %s388 = ssub.s32 %s29, %s36
      %p389 = scmp.eq.s32.totalorder %s388, 0
      %s391 = sadd.s32 %s390, 1
      %s392 = scalar_select %p389, %s390, %s391
      %p395 = pneg %p389
      %p396 = scmp.eq.s32.totalorder %s29, 1
      %p397 = por %p395, %p396
      %p398 = scmp.ne.s32.totalorder %s390, %s393
      %p399 = scmp.eq.s32.totalorder %s29, 0
      %p400 = por %p398, %p399
      %p401 = scmp.ne.s32.totalorder %s390, %s393
      %p402 = scmp.eq.s32.totalorder %s34, 1
      %p403 = por %p401, %p402
      %p404 = scmp.ne.s32.totalorder %s393, %s394
      %p405 = scmp.eq.s32.totalorder %s34, 0
      %p406 = por %p404, %p405
      %p407 = scmp.ne.s32.totalorder %s393, %s394
      %p408 = scmp.eq.s32.totalorder %s35, 1
      %p409 = por %p407, %p408
      %p411 = scmp.ne.s32.totalorder %s394, %s410
      %p412 = scmp.eq.s32.totalorder %s35, 0
      %p413 = por %p411, %p412
      %p414 = scmp.le.s32.totalorder 1, %s29
      %p415 = scmp.lt.s32.totalorder %s29, 3
      %p416 = pnand %p414, %p415
      %p417 = pneg %p416
      // Predicated region
      $region9: #{tpu_custom_call.1} parent=5 // pred_check
        _
      $region10: #{tpu_custom_call.1} parent=5 // pred_check_branch
        %419 = sbr.rel (%p416) target = $region12
      $region11: #{tpu_custom_call.1} parent=5 // pred_region
        %s420 = ssub.s32 %s29, 1
        // Predicated region
        $region13: #{tpu_custom_call.1} parent=11 // pred_check
          %p421 = pneg %p76
        $region14: #{tpu_custom_call.1} parent=11 // pred_check_branch
          %423 = sbr.rel (%p421) target = $region16
        $region15: #{tpu_custom_call.1} parent=11 // pred_region
          _
        $region16: #{tpu_custom_call.1} parent=11 // pred_fallthru
          _
        // Predicated region
        $region17: #{tpu_custom_call.1} parent=11 // pred_check
          %p424 = pneg %p97
        $region18: #{tpu_custom_call.1} parent=11 // pred_check_branch
          %426 = sbr.rel (%p424) target = $region20
        $region19: #{tpu_custom_call.1} parent=11 // pred_region
          _
        $region20: #{tpu_custom_call.1} parent=11 // pred_fallthru
          _
        // Predicated region
        $region21: #{tpu_custom_call.1} parent=11 // pred_check
          %p427 = pneg %p118
        $region22: #{tpu_custom_call.1} parent=11 // pred_check_branch
          %429 = sbr.rel (%p427) target = $region24
        $region23: #{tpu_custom_call.1} parent=11 // pred_region
          _
        $region24: #{tpu_custom_call.1} parent=11 // pred_fallthru
          _
        // Predicated region
        $region25: #{tpu_custom_call.1} parent=11 // pred_check
          %p430 = pneg %p139
        $region26: #{tpu_custom_call.1} parent=11 // pred_check_branch
          %432 = sbr.rel (%p430) target = $region28
        $region27: #{tpu_custom_call.1} parent=11 // pred_region
          _
        $region28: #{tpu_custom_call.1} parent=11 // pred_fallthru
          _
        // Predicated region
        $region29: #{tpu_custom_call.1} parent=11 // pred_check
          %p433 = pneg %p160
        $region30: #{tpu_custom_call.1} parent=11 // pred_check_branch
          %435 = sbr.rel (%p433) target = $region32
        $region31: #{tpu_custom_call.1} parent=11 // pred_region
          _
        $region32: #{tpu_custom_call.1} parent=11 // pred_fallthru
          _
        // Predicated region
        $region33: #{tpu_custom_call.1} parent=11 // pred_check
          %p436 = pneg %p181
        $region34: #{tpu_custom_call.1} parent=11 // pred_check_branch
          %438 = sbr.rel (%p436) target = $region36
        $region35: #{tpu_custom_call.1} parent=11 // pred_region
          _
        $region36: #{tpu_custom_call.1} parent=11 // pred_fallthru
          _
        // Predicated region
        $region37: #{tpu_custom_call.1} parent=11 // pred_check
          %p439 = pneg %p202
        $region38: #{tpu_custom_call.1} parent=11 // pred_check_branch
          %441 = sbr.rel (%p439) target = $region40
        $region39: #{tpu_custom_call.1} parent=11 // pred_region
          _
        $region40: #{tpu_custom_call.1} parent=11 // pred_fallthru
          _
        // Predicated region
        $region41: #{tpu_custom_call.1} parent=11 // pred_check
          %p442 = pneg %p223
        $region42: #{tpu_custom_call.1} parent=11 // pred_check_branch
          %444 = sbr.rel (%p442) target = $region44
        $region43: #{tpu_custom_call.1} parent=11 // pred_region
          _
        $region44: #{tpu_custom_call.1} parent=11 // pred_fallthru
          _
        // Predicated region
        $region45: #{tpu_custom_call.1} parent=11 // pred_check
          %p445 = pneg %p244
        $region46: #{tpu_custom_call.1} parent=11 // pred_check_branch
          %447 = sbr.rel (%p445) target = $region48
        $region47: #{tpu_custom_call.1} parent=11 // pred_region
          _
        $region48: #{tpu_custom_call.1} parent=11 // pred_fallthru
          _
        // Predicated region
        $region49: #{tpu_custom_call.1} parent=11 // pred_check
          %p448 = pneg %p265
        $region50: #{tpu_custom_call.1} parent=11 // pred_check_branch
          %450 = sbr.rel (%p448) target = $region52
        $region51: #{tpu_custom_call.1} parent=11 // pred_region
          _
        $region52: #{tpu_custom_call.1} parent=11 // pred_fallthru
          _
        // Predicated region
        $region53: #{tpu_custom_call.1} parent=11 // pred_check
          %p451 = pneg %p312
        $region54: #{tpu_custom_call.1} parent=11 // pred_check_branch
          %453 = sbr.rel (%p451) target = $region56
        $region55: #{tpu_custom_call.1} parent=11 // pred_region
          _
        $region56: #{tpu_custom_call.1} parent=11 // pred_fallthru
          _
        // Predicated region
        $region57: #{tpu_custom_call.1} parent=11 // pred_check
          %p454 = pneg %p333
        $region58: #{tpu_custom_call.1} parent=11 // pred_check_branch
          %456 = sbr.rel (%p454) target = $region60
        $region59: #{tpu_custom_call.1} parent=11 // pred_region
          _
        $region60: #{tpu_custom_call.1} parent=11 // pred_fallthru
          _
        // Predicated region
        $region61: #{tpu_custom_call.1} parent=11 // pred_check
          %p457 = pneg %p354
        $region62: #{tpu_custom_call.1} parent=11 // pred_check_branch
          %459 = sbr.rel (%p457) target = $region64
        $region63: #{tpu_custom_call.1} parent=11 // pred_region
          _
        $region64: #{tpu_custom_call.1} parent=11 // pred_fallthru
          _
      $region12: #{tpu_custom_call.1} parent=5 // pred_fallthru
        _
      %p460 = scmp.lt.s32.totalorder %s29, 2
      // Predicated region
      $region65: #{tpu_custom_call.1} parent=5 // pred_check
        %p461 = pneg %p460
      $region66: #{tpu_custom_call.1} parent=5 // pred_check_branch
        %463 = sbr.rel (%p461) target = $region68
      $region67: #{tpu_custom_call.1} parent=5 // pred_region
        // Predicated region
        $region69: #{tpu_custom_call.1} parent=67 // pred_check
          %p464 = pneg %p49
        $region70: #{tpu_custom_call.1} parent=67 // pred_check_branch
          %466 = sbr.rel (%p464) target = $region72
        $region71: #{tpu_custom_call.1} parent=67 // pred_region
          %p467 = scmp.lt.s32.totalorder %s29, 1
          %s468 = scalar_select %p467, %s29, 1
          %s469 = smul.addr %s468, 2
          %s470 = smul.addr %s469, 4
          %s471 = scalar_lea.vmem %s0, %s470
        $region72: #{tpu_custom_call.1} parent=67 // pred_fallthru
          _
        // Predicated region
        $region73: #{tpu_custom_call.1} parent=67 // pred_check
          %p472 = pneg %p285
        $region74: #{tpu_custom_call.1} parent=67 // pred_check_branch
          %474 = sbr.rel (%p472) target = $region76
        $region75: #{tpu_custom_call.1} parent=67 // pred_region
          %p475 = scmp.lt.s32.totalorder %s29, 1
          %s476 = scalar_select %p475, %s29, 1
          %s477 = smul.addr %s476, 32
          %s478 = smul.addr %s477, 8
          %s479 = scalar_lea.vmem %s11, %s478
        $region76: #{tpu_custom_call.1} parent=67 // pred_fallthru
          _
      $region68: #{tpu_custom_call.1} parent=5 // pred_fallthru
        _
      %p480 = scmp.le.s32.totalorder 1, %s29
      %p481 = scmp.lt.s32.totalorder %s29, 3
      %p482 = pnand %p480, %p481
      %p483 = pneg %p482
      // Predicated region
      $region77: #{tpu_custom_call.1} parent=5 // pred_check
        _
      $region78: #{tpu_custom_call.1} parent=5 // pred_check_branch
        %485 = sbr.rel (%p482) target = $region80
      $region79: #{tpu_custom_call.1} parent=5 // pred_region
        %s486 = ssub.s32 %s29, 1
        %p487 = scmp.lt.s32.totalorder %s34, 1
        %s488 = scalar_select %p487, %s34, 1
        %s489 = smul.addr %s488, 2
        %s490 = smul.addr %s489, 4
        %s491 = scalar_lea.vmem %s0, %s490
        %p492 = pneg %p55
        %p493 = pneg %p52
        %p494 = pneg %p76
        %p495 = pneg %p73
        %p496 = pneg %p97
        %p497 = pneg %p94
        %p498 = pneg %p118
        %p499 = pneg %p115
        %p500 = pneg %p139
        %p501 = pneg %p136
        %p502 = pneg %p160
        %p503 = pneg %p157
        %p504 = pneg %p181
        %p505 = pneg %p178
        %p506 = pneg %p202
        %p507 = pneg %p199
        %p508 = pneg %p223
        %p509 = pneg %p220
        %p510 = pneg %p244
        %p511 = pneg %p241
        %p512 = pneg %p265
        %p513 = pneg %p262
        %p514 = scmp.lt.s32.totalorder %s34, 1
        %s515 = scalar_select %p514, %s34, 1
        %s516 = smul.addr %s515, 32
        %s517 = smul.addr %s516, 8
        %s518 = scalar_lea.vmem %s11, %s517
        %p519 = pneg %p291
        %p520 = pneg %p288
        %p521 = pneg %p312
        %p522 = pneg %p309
        %p523 = pneg %p333
        %p524 = pneg %p330
        %p525 = pneg %p354
        %p526 = pneg %p351
        %p527 = pneg %p380
        %p528 = pneg %p377
        %s529 = sand.u32 %s367, 1
        %s530 = scalar_lea.sflag [#allocation3], %s529
        %s531 = sand.u32 %s367, 1
        %s532 = smul.addr %s531, 16
        %s533 = scalar_lea.vmem [#allocation2], %s532
        %p534 = pneg %p406
        %p535 = pneg %p403
        %s536 = sand.u32 %s393, 1
        %s537 = scalar_lea.sflag [#allocation5], %s536
        %s538 = sand.u32 %s393, 1
        %s539 = smul.addr %s538, 8
        %s540 = scalar_lea.vmem [#allocation4], %s539
        %p541 = scmp.lt.s32.totalorder %s34, 1
        %s542 = scalar_select %p541, %s34, 1
        %s543 = smul.addr %s542, 2
        %s544 = smul.addr %s543, 4
        %s545 = scalar_lea.vmem %s0, %s544
        %p546 = scmp.lt.s32.totalorder %s34, 1
        %s547 = scalar_select %p546, %s34, 1
        %s548 = smul.addr %s547, 32
        %s549 = smul.addr %s548, 8
        %s550 = scalar_lea.vmem %s11, %s549
        %v552 = vld [vmem:[%s545] sm:$0xff]
        %v554 = vcombine.high %v552, %v552
        %556 = vrot.lane.b32.xlu0 %v552, 17
        %v557 = vpop.permute.xlu0 %556
        %558 = vrot.lane.b32.xlu0 %v554, 17
        %v559 = vpop.permute.xlu0 %558
        %v560 = vlaneseq
        %v561 = vand.u32 %v560, 127
        %vm562 = vcmp.lt.s32.totalorder %v561, 17
        %v563 = vsel %vm562, %v557, %v559
        %v564 = vsel %vm562, %v559, %v557
        %565 = vrot.lane.b32.xlu0 %v552, 16
        %v566 = vpop.permute.xlu0 %565
        %567 = vrot.lane.b32.xlu0 %v554, 16
        %v568 = vpop.permute.xlu0 %567
        %vm569 = vcmp.lt.s32.totalorder %v561, 16
        %v570 = vsel %vm569, %v566, %v568
        %v571 = vsel %vm569, %v568, %v566
        %572 = vrot.lane.b32.xlu0 %v552, 15
        %v573 = vpop.permute.xlu0 %572
        %574 = vrot.lane.b32.xlu0 %v554, 15
        %v575 = vpop.permute.xlu0 %574
        %vm576 = vcmp.lt.s32.totalorder %v561, 15
        %v577 = vsel %vm576, %v573, %v575
        %v578 = vsel %vm576, %v575, %v573
        %579 = vrot.lane.b32.xlu0 %v552, 1
        %v580 = vpop.permute.xlu0 %579
        %581 = vrot.lane.b32.xlu0 %v554, 1
        %v582 = vpop.permute.xlu0 %581
        %vm583 = vcmp.lt.s32.totalorder %v561, 1
        %v584 = vsel %vm583, %v580, %v582
        %v585 = vsel %vm583, %v582, %v580
        %586 = vrot.lane.b32.xlu0 %v552, 127
        %v587 = vpop.permute.xlu0 %586
        %588 = vrot.lane.b32.xlu0 %v554, 127
        %v589 = vpop.permute.xlu0 %588
        %vm590 = vcmp.lt.s32.totalorder %v561, 127
        %v591 = vsel %vm590, %v587, %v589
        %v592 = vsel %vm590, %v589, %v587
        %593 = vrot.lane.b32.xlu0 %v552, 113
        %v594 = vpop.permute.xlu0 %593
        %595 = vrot.lane.b32.xlu0 %v554, 113
        %v596 = vpop.permute.xlu0 %595
        %vm597 = vcmp.lt.s32.totalorder %v561, 113
        %v598 = vsel %vm597, %v594, %v596
        %v599 = vsel %vm597, %v596, %v594
        %600 = vrot.lane.b32.xlu0 %v552, 112
        %v601 = vpop.permute.xlu0 %600
        %602 = vrot.lane.b32.xlu0 %v554, 112
        %v603 = vpop.permute.xlu0 %602
        %vm604 = vcmp.lt.s32.totalorder %v561, 112
        %v605 = vsel %vm604, %v601, %v603
        %v606 = vsel %vm604, %v603, %v601
        %607 = vrot.lane.b32.xlu0 %v552, 111
        %v608 = vpop.permute.xlu0 %607
        %609 = vrot.lane.b32.xlu0 %v554, 111
        %v610 = vpop.permute.xlu0 %609
        %vm611 = vcmp.lt.s32.totalorder %v561, 111
        %v612 = vsel %vm611, %v608, %v610
        %v613 = vsel %vm611, %v610, %v608
        %v616 = vrot.slane %v571, 4
        %v617 = vrot.slane %v570, 4
        %v622 = vrot.slane %v585, 4
        %v623 = vrot.slane %v584, 4
        %v628 = vrot.slane %v591, 4
        %v629 = vrot.slane %v592, 4
        %v634 = vrot.slane %v605, 4
        %v635 = vrot.slane %v606, 4
        %vm638 = vcmask 1043456
        %v639 = vsel %vm638, %v564, %v616
        %v640 = vsel %vm638, %v563, %v617
        %v641 = vsel %vm638, %v578, %v622
        %v642 = vsel %vm638, %v577, %v623
        %v643 = vsel %vm638, %v552, %v628
        %v644 = vsel %vm638, %v554, %v629
        %v645 = vsel %vm638, %v598, %v634
        %v646 = vsel %vm638, %v599, %v635
        %v647 = vld [vmem:[%s1] sm:$0xff]
        %v648 = vld [vmem:[%s1 + $0x8] sm:$0xff]
        %v649 = vld [vmem:[%s1 + $0x10] sm:$0xff]
        %v650 = vld [vmem:[%s1 + $0x18] sm:$0xff]
        %v651 = vld [vmem:[%s1 + $0x20] sm:$0xff]
        %v652 = vld [vmem:[%s1 + $0x28] sm:$0xff]
        %v653 = vld [vmem:[%s1 + $0x30] sm:$0xff]
        %v654 = vld [vmem:[%s1 + $0x38] sm:$0xff]
        %v655 = vld [vmem:[%s1 + $0x40] sm:$0xf]
        %v656 = vld [vmem:[%s1 + $0x48] sm:$0xf]
        %v657 = vmul.f32 %v639, %v647
        %v658 = vmul.f32 %v640, %v648
        %v659 = vmul.f32 %v641, %v649
        %v660 = vmul.f32 %v642, %v650
        %v661 = vmul.f32 %v643, %v651
        %v662 = vmul.f32 %v644, %v652
        %v663 = vmul.f32 %v645, %v653
        %v664 = vmul.f32 %v646, %v654
        %v665 = vmul.f32 %v612, %v655
        %v666 = vmul.f32 %v613, %v656
        %v667 = vpack.c.bf16 %v659, %v657
        %v668 = vpack.c.bf16 %v660, %v658
        %v669 = vpack.c.bf16 %v663, %v661
        %v670 = vpack.c.bf16 %v664, %v662
        %v671 = vpack.c.bf16 %v665, %v665
        %v672 = vpack.c.bf16 %v666, %v666
        %v673 = vld [vmem:[%s3] sm:$0xf]
        %v674 = vld [vmem:[%s3 + $0x4] sm:$0xf]
        %v675 = vld [vmem:[%s4] sm:$0xff]
        %v676 = vld [vmem:[%s4 + $0x8] sm:$0xff]
        %678 = vset.pattern.permute.xlu0 0
        %679 = vperm.xlu0 %678, %v675
        %v680 = vpop.permute.xlu0 %679
        %683 = vset.pattern.permute.xlu0 0
        %684 = vperm.xlu0 %683, %v676
        %v685 = vpop.permute.xlu0 %684
        %v689 = vunpack.c.l.b16 %v673
        %v690 = vunpack.c.l.b16 %v674
        %v691 = vpack.c.b16 %v690, %v689
        %vm692 = vcmask 293888
        %v694 = vsel %vm692, %v691, 0
        %vm696 = vcmask 1041408
        %v698 = vsel %vm696, %v671, 0
        %v701 = vsel %vm696, %v672, 0
        %703 = vmatprep.subr.bf16.mxu0 0
        %704 = vmatpush1.bf16.msra.mxu0 0
        %705 = vmatprep.subr.bf16.mxu0 0
        %706 = vmatpush1.bf16.msra.mxu0 0
        %707 = vmatprep.subr.bf16.mxu0 0
        %708 = vmatpush1.bf16.msra.mxu0 0
        %709 = vmatprep.subr.bf16.mxu0 0
        %710 = vmatpush1.bf16.msra.mxu0 0
        %711 = vmatprep.subr.bf16.mxu0 0
        %712 = vmatpush1.bf16.msra.mxu0 0
        %713 = vmatprep.subr.bf16.mxu0 %v701
        %714 = vmatpush1.bf16.msra.mxu0 %v698
        %715 = vmatprep.subr.bf16.mxu0 %v670
        %716 = vmatpush1.bf16.msra.mxu0 %v669
        %717 = vmatprep.subr.bf16.mxu0 %v668
        %718 = vmatpush1.bf16.msra.mxu0 %v667
        %719 = vmatprep.subr.bf16.mxu0 0
        %720 = vmatpush2.bf16.msra.mxu0 0
        %721 = vmatprep.subr.bf16.mxu0 0
        %722 = vmatpush2.bf16.msra.mxu0 0
        %723 = vmatprep.subr.bf16.mxu0 0
        %724 = vmatpush2.bf16.msra.mxu0 0
        %725 = vmatprep.subr.bf16.mxu0 0
        %726 = vmatpush2.bf16.msra.mxu0 0
        %727 = vmatprep.subr.bf16.mxu0 0
        %728 = vmatpush2.bf16.msra.mxu0 0
        %729 = vmatprep.subr.bf16.mxu0 0
        %730 = vmatpush2.bf16.msra.mxu0 0
        %731 = vmatprep.subr.bf16.mxu0 0
        %732 = vmatpush2.bf16.msra.mxu0 0
        %733 = vmatprep.subr.bf16.mxu0 0
        %734 = vmatpush2.bf16.msra.mxu0 0
        %735 = vmatprep.mubr.bf16.mxu0 0
        %736 = vmatmul.mubr.bf16.gmra.mxu0 %v694
        %v737 = vpop.f32.mrf.mxu0
        %v738 = vadd.f32 %v680, %v737
        %v739 = vpop.f32.mrf.mxu0
        %v740 = vadd.f32 %v680, %v739
        %v741 = vpop.f32.mrf.mxu0
        %v742 = vadd.f32 %v685, %v741
        %v743 = vpop.f32.mrf.mxu0
        %v744 = vadd.f32 %v685, %v743
        %745 = vdwg.mxu0
        %v746 = vmax.f32 %v738, 0.0
        %v747 = vmax.f32 %v740, 0.0
        %748 = vrot.lane.b32.xlu0 %v746, 17
        %v749 = vpop.permute.xlu0 %748
        %750 = vrot.lane.b32.xlu0 %v747, 17
        %v751 = vpop.permute.xlu0 %750
        %v752 = vsel %vm562, %v749, %v751
        %v753 = vsel %vm562, %v751, %v749
        %754 = vrot.lane.b32.xlu0 %v746, 16
        %v755 = vpop.permute.xlu0 %754
        %756 = vrot.lane.b32.xlu0 %v747, 16
        %v757 = vpop.permute.xlu0 %756
        %v758 = vsel %vm569, %v755, %v757
        %v759 = vsel %vm569, %v757, %v755
        %760 = vrot.lane.b32.xlu0 %v746, 15
        %v761 = vpop.permute.xlu0 %760
        %762 = vrot.lane.b32.xlu0 %v747, 15
        %v763 = vpop.permute.xlu0 %762
        %v764 = vsel %vm576, %v761, %v763
        %v765 = vsel %vm576, %v763, %v761
        %766 = vrot.lane.b32.xlu0 %v746, 1
        %v767 = vpop.permute.xlu0 %766
        %768 = vrot.lane.b32.xlu0 %v747, 1
        %v769 = vpop.permute.xlu0 %768
        %v770 = vsel %vm583, %v767, %v769
        %v771 = vsel %vm583, %v769, %v767
        %772 = vrot.lane.b32.xlu0 %v746, 127
        %v773 = vpop.permute.xlu0 %772
        %774 = vrot.lane.b32.xlu0 %v747, 127
        %v775 = vpop.permute.xlu0 %774
        %v776 = vsel %vm590, %v773, %v775
        %v777 = vsel %vm590, %v775, %v773
        %778 = vrot.lane.b32.xlu0 %v746, 113
        %v779 = vpop.permute.xlu0 %778
        %780 = vrot.lane.b32.xlu0 %v747, 113
        %v781 = vpop.permute.xlu0 %780
        %v782 = vsel %vm597, %v779, %v781
        %v783 = vsel %vm597, %v781, %v779
        %784 = vrot.lane.b32.xlu0 %v746, 112
        %v785 = vpop.permute.xlu0 %784
        %786 = vrot.lane.b32.xlu0 %v747, 112
        %v787 = vpop.permute.xlu0 %786
        %v788 = vsel %vm604, %v785, %v787
        %v789 = vsel %vm604, %v787, %v785
        %790 = vrot.lane.b32.xlu0 %v746, 111
        %v791 = vpop.permute.xlu0 %790
        %792 = vrot.lane.b32.xlu0 %v747, 111
        %v793 = vpop.permute.xlu0 %792
        %v794 = vsel %vm611, %v791, %v793
        %v795 = vsel %vm611, %v793, %v791
        %v796 = vld [vmem:[%s2] sm:$0xff]
        %v797 = vld [vmem:[%s2 + $0x8] sm:$0xff]
        %v798 = vld [vmem:[%s2 + $0x10] sm:$0xff]
        %v799 = vld [vmem:[%s2 + $0x18] sm:$0xff]
        %v800 = vld [vmem:[%s2 + $0x20] sm:$0xff]
        %v801 = vld [vmem:[%s2 + $0x28] sm:$0xff]
        %v802 = vld [vmem:[%s2 + $0x30] sm:$0xff]
        %v803 = vld [vmem:[%s2 + $0x38] sm:$0xff]
        %v804 = vld [vmem:[%s2 + $0x40] sm:$0xff]
        %v805 = vld [vmem:[%s2 + $0x48] sm:$0xff]
        %v806 = vld [vmem:[%s2 + $0x50] sm:$0xff]
        %v807 = vld [vmem:[%s2 + $0x58] sm:$0xff]
        %v808 = vld [vmem:[%s2 + $0x60] sm:$0xff]
        %v809 = vld [vmem:[%s2 + $0x68] sm:$0xff]
        %v810 = vld [vmem:[%s2 + $0x70] sm:$0xff]
        %v811 = vld [vmem:[%s2 + $0x78] sm:$0xff]
        %v812 = vld [vmem:[%s2 + $0x80] sm:$0xff]
        %v813 = vld [vmem:[%s2 + $0x88] sm:$0xff]
        %v814 = vmul.f32 %v753, %v796
        %v815 = vmul.f32 %v752, %v797
        %v816 = vmul.f32 %v759, %v798
        %v817 = vmul.f32 %v758, %v799
        %v818 = vmul.f32 %v765, %v800
        %v819 = vmul.f32 %v764, %v801
        %v820 = vmul.f32 %v771, %v802
        %v821 = vmul.f32 %v770, %v803
        %v822 = vmul.f32 %v746, %v804
        %v823 = vmul.f32 %v747, %v805
        %v824 = vmul.f32 %v776, %v806
        %v825 = vmul.f32 %v777, %v807
        %v826 = vmul.f32 %v782, %v808
        %v827 = vmul.f32 %v783, %v809
        %v828 = vmul.f32 %v788, %v810
        %v829 = vmul.f32 %v789, %v811
        %v830 = vmul.f32 %v794, %v812
        %v831 = vmul.f32 %v795, %v813
        %v832 = vpack.c.bf16 %v816, %v814
        %v833 = vpack.c.bf16 %v817, %v815
        %v834 = vpack.c.bf16 %v820, %v818
        %v835 = vpack.c.bf16 %v821, %v819
        %v836 = vpack.c.bf16 %v824, %v822
        %v837 = vpack.c.bf16 %v825, %v823
        %v838 = vpack.c.bf16 %v828, %v826
        %v839 = vpack.c.bf16 %v829, %v827
        %v840 = vpack.c.bf16 %v830, %v830
        %v841 = vpack.c.bf16 %v831, %v831
        %v842 = vld [vmem:[%s5] sm:$0xf]
        %v843 = vld [vmem:[%s6] sm:$0xff]
        %845 = vset.pattern.permute.xlu0 0
        %846 = vperm.xlu0 %845, %v843
        %v847 = vpop.permute.xlu0 %846
        %vm849 = vcmask 588800
        %v851 = vsel %vm849, %v842, 0
        %v854 = vsel %vm638, %v840, 0
        %v857 = vsel %vm638, %v841, 0
        %859 = vmatprep.subr.bf16.mxu0 0
        %860 = vmatpush1.bf16.msra.mxu0 0
        %861 = vmatprep.subr.bf16.mxu0 0
        %862 = vmatpush1.bf16.msra.mxu0 0
        %863 = vmatprep.subr.bf16.mxu0 0
        %864 = vmatpush1.bf16.msra.mxu0 0
        %865 = vmatprep.subr.bf16.mxu0 %v857
        %866 = vmatpush1.bf16.msra.mxu0 %v854
        %867 = vmatprep.subr.bf16.mxu0 %v839
        %868 = vmatpush1.bf16.msra.mxu0 %v838
        %869 = vmatprep.subr.bf16.mxu0 %v837
        %870 = vmatpush1.bf16.msra.mxu0 %v836
        %871 = vmatprep.subr.bf16.mxu0 %v835
        %872 = vmatpush1.bf16.msra.mxu0 %v834
        %873 = vmatprep.subr.bf16.mxu0 %v833
        %874 = vmatpush1.bf16.msra.mxu0 %v832
        %875 = vmatprep.subr.bf16.mxu0 0
        %876 = vmatpush2.bf16.msra.mxu0 0
        %877 = vmatprep.subr.bf16.mxu0 0
        %878 = vmatpush2.bf16.msra.mxu0 0
        %879 = vmatprep.subr.bf16.mxu0 0
        %880 = vmatpush2.bf16.msra.mxu0 0
        %881 = vmatprep.subr.bf16.mxu0 0
        %882 = vmatpush2.bf16.msra.mxu0 0
        %883 = vmatprep.subr.bf16.mxu0 0
        %884 = vmatpush2.bf16.msra.mxu0 0
        %885 = vmatprep.subr.bf16.mxu0 0
        %886 = vmatpush2.bf16.msra.mxu0 0
        %887 = vmatprep.subr.bf16.mxu0 0
        %888 = vmatpush2.bf16.msra.mxu0 0
        %889 = vmatprep.subr.bf16.mxu0 0
        %890 = vmatpush2.bf16.msra.mxu0 0
        %891 = vmatprep.mubr.bf16.mxu0 0
        %892 = vmatmul.mubr.bf16.gmra.mxu0 %v851
        %v893 = vpop.f32.mrf.mxu0
        %v894 = vadd.f32 %v847, %v893
        %v895 = vpop.f32.mrf.mxu0
        %v896 = vadd.f32 %v847, %v895
        %v897 = vpop.f32.mrf.mxu0
        %v898 = vpop.f32.mrf.mxu0
        %899 = vdwg.mxu0
        %v900 = vadd.f32 %v894, %v742
        %v901 = vadd.f32 %v896, %v744
        %v902 = vmax.f32 %v900, 0.0
        %v903 = vmax.f32 %v901, 0.0
        %v904 = vpack.c.bf16 %v902, %v902
        %v905 = vpack.c.bf16 %v903, %v903
        %v906 = vld [vmem:[%s7] sm:$0xf]
        %v907 = vld [vmem:[%s7 + $0x4] sm:$0xf]
        %v908 = vld [vmem:[%s7 + $0x8] sm:$0xf]
        %v909 = vld [vmem:[%s8] sm:$0xff]
        %v910 = vld [vmem:[%s8 + $0x8] sm:$0xff]
        %v911 = vld [vmem:[%s8 + $0x10] sm:$0xff]
        %913 = vset.pattern.permute.xlu0 0
        %914 = vperm.xlu0 %913, %v909
        %v915 = vpop.permute.xlu0 %914
        %918 = vset.pattern.permute.xlu0 0
        %919 = vperm.xlu0 %918, %v910
        %v920 = vpop.permute.xlu0 %919
        %923 = vset.pattern.permute.xlu0 0
        %924 = vperm.xlu0 %923, %v911
        %v925 = vpop.permute.xlu0 %924
        %v930 = vunpack.c.l.b16 %v906
        %v931 = vunpack.c.l.b16 %v907
        %v932 = vunpack.c.l.b16 %v908
        %v933 = vpack.c.b16 %v931, %v930
        %v934 = vpack.c.b16 %v932, %v932
        %vm935 = vcmask 64512
        %v937 = vsel %vm935, %v933, 0
        %v940 = vsel %vm935, %v934, 0
        %v943 = vsel %vm638, %v904, 0
        %v946 = vsel %vm638, %v905, 0
        %948 = vmatprep.subr.bf16.mxu0 0
        %949 = vmatpush1.bf16.msra.mxu0 0
        %950 = vmatprep.subr.bf16.mxu0 0
        %951 = vmatpush1.bf16.msra.mxu0 0
        %952 = vmatprep.subr.bf16.mxu0 0
        %953 = vmatpush1.bf16.msra.mxu0 0
        %954 = vmatprep.subr.bf16.mxu0 0
        %955 = vmatpush1.bf16.msra.mxu0 0
        %956 = vmatprep.subr.bf16.mxu0 0
        %957 = vmatpush1.bf16.msra.mxu0 0
        %958 = vmatprep.subr.bf16.mxu0 0
        %959 = vmatpush1.bf16.msra.mxu0 0
        %960 = vmatprep.subr.bf16.mxu0 0
        %961 = vmatpush1.bf16.msra.mxu0 0
        %962 = vmatprep.subr.bf16.mxu0 %v946
        %963 = vmatpush1.bf16.msra.mxu0 %v943
        %964 = vmatprep.subr.bf16.mxu0 0
        %965 = vmatpush2.bf16.msra.mxu0 0
        %966 = vmatprep.subr.bf16.mxu0 0
        %967 = vmatpush2.bf16.msra.mxu0 0
        %968 = vmatprep.subr.bf16.mxu0 0
        %969 = vmatpush2.bf16.msra.mxu0 0
        %970 = vmatprep.subr.bf16.mxu0 0
        %971 = vmatpush2.bf16.msra.mxu0 0
        %972 = vmatprep.subr.bf16.mxu0 0
        %973 = vmatpush2.bf16.msra.mxu0 0
        %974 = vmatprep.subr.bf16.mxu0 0
        %975 = vmatpush2.bf16.msra.mxu0 0
        %976 = vmatprep.subr.bf16.mxu0 0
        %977 = vmatpush2.bf16.msra.mxu0 0
        %978 = vmatprep.subr.bf16.mxu0 0
        %979 = vmatpush2.bf16.msra.mxu0 0
        %980 = vmatprep.mubr.bf16.mxu0 0
        %981 = vmatmul.mubr.bf16.gmra.mxu0 %v937
        %v982 = vpop.f32.mrf.mxu0
        %v983 = vadd.f32 %v915, %v982
        %v984 = vpop.f32.mrf.mxu0
        %v985 = vadd.f32 %v915, %v984
        %v986 = vpop.f32.mrf.mxu0
        %v987 = vadd.f32 %v920, %v986
        %v988 = vpop.f32.mrf.mxu0
        %v989 = vadd.f32 %v920, %v988
        %990 = vmatprep.mubr.bf16.mxu0 0
        %991 = vmatmul.mubr.bf16.gmra.mxu0 %v940
        %v992 = vpop.f32.mrf.mxu0
        %v993 = vadd.f32 %v925, %v992
        %v994 = vpop.f32.mrf.mxu0
        %v995 = vadd.f32 %v925, %v994
        %v996 = vpop.f32.mrf.mxu0
        %v997 = vpop.f32.mrf.mxu0
        %998 = vdwg.mxu0
        %v999 = vpack.c.bf16 %v983, %v983
        %v1000 = vpack.c.bf16 %v985, %v985
        %v1001 = vpack.c.bf16 %v987, %v987
        %v1002 = vpack.c.bf16 %v989, %v989
        %v1003 = vpack.c.bf16 %v993, %v993
        %v1004 = vpack.c.bf16 %v995, %v995
        %v1005 = vld [vmem:[%s550] sm:$0xff]
        %v1006 = vld [vmem:[%s550 + $0x8] sm:$0xff]
        %v1007 = vld [vmem:[%s550 + $0x10] sm:$0xff]
        %v1008 = vld [vmem:[%s550 + $0x18] sm:$0xff]
        %v1009 = vld [vmem:[%s550 + $0x20] sm:$0xff]
        %v1010 = vld [vmem:[%s550 + $0x28] sm:$0xff]
        %v1011 = vld [vmem:[%s550 + $0x30] sm:$0xff]
        %v1012 = vld [vmem:[%s550 + $0x38] sm:$0xff]
        %v1013 = vld [vmem:[%s550 + $0x40] sm:$0xff]
        %v1014 = vld [vmem:[%s550 + $0x48] sm:$0xff]
        %v1015 = vld [vmem:[%s550 + $0x50] sm:$0xff]
        %v1016 = vld [vmem:[%s550 + $0x58] sm:$0xff]
        %v1017 = vld [vmem:[%s550 + $0x60] sm:$0xff]
        %v1018 = vld [vmem:[%s550 + $0x68] sm:$0xff]
        %v1019 = vld [vmem:[%s550 + $0x70] sm:$0xff]
        %v1020 = vld [vmem:[%s550 + $0x78] sm:$0xff]
        %v1021 = vld [vmem:[%s550 + $0x80] sm:$0xff]
        %v1022 = vld [vmem:[%s550 + $0x88] sm:$0xff]
        %v1023 = vld [vmem:[%s550 + $0x90] sm:$0xff]
        %v1024 = vld [vmem:[%s550 + $0x98] sm:$0xff]
        %v1025 = vld [vmem:[%s550 + $0xa0] sm:$0xff]
        %v1026 = vld [vmem:[%s550 + $0xa8] sm:$0xff]
        %v1027 = vld [vmem:[%s550 + $0xb0] sm:$0xff]
        %v1028 = vld [vmem:[%s550 + $0xb8] sm:$0xff]
        %v1029 = vld [vmem:[%s550 + $0xc0] sm:$0xff]
        %v1030 = vld [vmem:[%s550 + $0xc8] sm:$0xff]
        %v1031 = vld [vmem:[%s550 + $0xd0] sm:$0xff]
        %v1032 = vld [vmem:[%s550 + $0xd8] sm:$0xff]
        %v1033 = vld [vmem:[%s550 + $0xe0] sm:$0xff]
        %v1034 = vld [vmem:[%s550 + $0xe8] sm:$0xff]
        %v1035 = vld [vmem:[%s550 + $0xf0] sm:$0xff]
        %v1036 = vld [vmem:[%s550 + $0xf8] sm:$0xff]
        %1038 = vset.pattern.permute.xlu0 0
        %1039 = vperm.xlu0 %1038, %v1005
        %v1040 = vpop.permute.xlu0 %1039
        %1043 = vset.pattern.permute.xlu0 0
        %1044 = vperm.xlu0 %1043, %v1006
        %v1045 = vpop.permute.xlu0 %1044
        %1048 = vset.pattern.permute.xlu0 0
        %1049 = vperm.xlu0 %1048, %v1007
        %v1050 = vpop.permute.xlu0 %1049
        %1053 = vset.pattern.permute.xlu0 0
        %1054 = vperm.xlu0 %1053, %v1008
        %v1055 = vpop.permute.xlu0 %1054
        %1058 = vset.pattern.permute.xlu0 0
        %1059 = vperm.xlu0 %1058, %v1009
        %v1060 = vpop.permute.xlu0 %1059
        %1063 = vset.pattern.permute.xlu0 0
        %1064 = vperm.xlu0 %1063, %v1010
        %v1065 = vpop.permute.xlu0 %1064
        %1068 = vset.pattern.permute.xlu0 0
        %1069 = vperm.xlu0 %1068, %v1011
        %v1070 = vpop.permute.xlu0 %1069
        %1073 = vset.pattern.permute.xlu0 0
        %1074 = vperm.xlu0 %1073, %v1012
        %v1075 = vpop.permute.xlu0 %1074
        %1078 = vset.pattern.permute.xlu0 0
        %1079 = vperm.xlu0 %1078, %v1013
        %v1080 = vpop.permute.xlu0 %1079
        %1083 = vset.pattern.permute.xlu0 0
        %1084 = vperm.xlu0 %1083, %v1014
        %v1085 = vpop.permute.xlu0 %1084
        %1088 = vset.pattern.permute.xlu0 0
        %1089 = vperm.xlu0 %1088, %v1015
        %v1090 = vpop.permute.xlu0 %1089
        %1093 = vset.pattern.permute.xlu0 0
        %1094 = vperm.xlu0 %1093, %v1016
        %v1095 = vpop.permute.xlu0 %1094
        %1098 = vset.pattern.permute.xlu0 0
        %1099 = vperm.xlu0 %1098, %v1017
        %v1100 = vpop.permute.xlu0 %1099
        %1103 = vset.pattern.permute.xlu0 0
        %1104 = vperm.xlu0 %1103, %v1018
        %v1105 = vpop.permute.xlu0 %1104
        %1108 = vset.pattern.permute.xlu0 0
        %1109 = vperm.xlu0 %1108, %v1019
        %v1110 = vpop.permute.xlu0 %1109
        %1113 = vset.pattern.permute.xlu0 0
        %1114 = vperm.xlu0 %1113, %v1020
        %v1115 = vpop.permute.xlu0 %1114
        %1118 = vset.pattern.permute.xlu0 0
        %1119 = vperm.xlu0 %1118, %v1021
        %v1120 = vpop.permute.xlu0 %1119
        %1123 = vset.pattern.permute.xlu0 0
        %1124 = vperm.xlu0 %1123, %v1022
        %v1125 = vpop.permute.xlu0 %1124
        %1128 = vset.pattern.permute.xlu0 0
        %1129 = vperm.xlu0 %1128, %v1023
        %v1130 = vpop.permute.xlu0 %1129
        %1133 = vset.pattern.permute.xlu0 0
        %1134 = vperm.xlu0 %1133, %v1024
        %v1135 = vpop.permute.xlu0 %1134
        %1138 = vset.pattern.permute.xlu0 0
        %1139 = vperm.xlu0 %1138, %v1025
        %v1140 = vpop.permute.xlu0 %1139
        %1143 = vset.pattern.permute.xlu0 0
        %1144 = vperm.xlu0 %1143, %v1026
        %v1145 = vpop.permute.xlu0 %1144
        %1148 = vset.pattern.permute.xlu0 0
        %1149 = vperm.xlu0 %1148, %v1027
        %v1150 = vpop.permute.xlu0 %1149
        %1153 = vset.pattern.permute.xlu0 0
        %1154 = vperm.xlu0 %1153, %v1028
        %v1155 = vpop.permute.xlu0 %1154
        %1158 = vset.pattern.permute.xlu0 0
        %1159 = vperm.xlu0 %1158, %v1029
        %v1160 = vpop.permute.xlu0 %1159
        %1163 = vset.pattern.permute.xlu0 0
        %1164 = vperm.xlu0 %1163, %v1030
        %v1165 = vpop.permute.xlu0 %1164
        %1168 = vset.pattern.permute.xlu0 0
        %1169 = vperm.xlu0 %1168, %v1031
        %v1170 = vpop.permute.xlu0 %1169
        %1173 = vset.pattern.permute.xlu0 0
        %1174 = vperm.xlu0 %1173, %v1032
        %v1175 = vpop.permute.xlu0 %1174
        %1178 = vset.pattern.permute.xlu0 0
        %1179 = vperm.xlu0 %1178, %v1033
        %v1180 = vpop.permute.xlu0 %1179
        %1183 = vset.pattern.permute.xlu0 0
        %1184 = vperm.xlu0 %1183, %v1034
        %v1185 = vpop.permute.xlu0 %1184
        %1188 = vset.pattern.permute.xlu0 0
        %1189 = vperm.xlu0 %1188, %v1035
        %v1190 = vpop.permute.xlu0 %1189
        %1193 = vset.pattern.permute.xlu0 0
        %1194 = vperm.xlu0 %1193, %v1036
        %v1195 = vpop.permute.xlu0 %1194
        %1197 = vxpose.xlu0.c.b16.start [1/8] %v1001, 128
        %1198 = vxpose.xlu0.c.b16.cont [2/8] 0, 128
        %1199 = vxpose.xlu0.c.b16.cont [3/8] 0, 128
        %1200 = vxpose.xlu0.c.b16.cont [4/8] 0, 128
        %1201 = vxpose.xlu0.c.b16.cont [5/8] 0, 128
        %1202 = vxpose.xlu0.c.b16.cont [6/8] 0, 128
        %1203 = vxpose.xlu0.c.b16.cont [7/8] 0, 128
        %1204 = vxpose.xlu0.c.b16.end [8/8] 0, 128
        %v1205 = vpop.trf.xlu0
        %v1206 = vpop.trf.xlu0
        %v1207 = vpop.trf.xlu0
        %v1208 = vpop.trf.xlu0
        %v1209 = vpop.trf.xlu0
        %v1210 = vpop.trf.xlu0
        %v1211 = vpop.trf.xlu0
        %v1212 = vpop.trf.xlu0
        %1213 = vxpose.xlu0.c.b16.start [1/8] %v1002, 128
        %1214 = vxpose.xlu0.c.b16.cont [2/8] 0, 128
        %1215 = vxpose.xlu0.c.b16.cont [3/8] 0, 128
        %1216 = vxpose.xlu0.c.b16.cont [4/8] 0, 128
        %1217 = vxpose.xlu0.c.b16.cont [5/8] 0, 128
        %1218 = vxpose.xlu0.c.b16.cont [6/8] 0, 128
        %1219 = vxpose.xlu0.c.b16.cont [7/8] 0, 128
        %1220 = vxpose.xlu0.c.b16.end [8/8] 0, 128
        %v1221 = vpop.trf.xlu0
        %v1222 = vpop.trf.xlu0
        %v1223 = vpop.trf.xlu0
        %v1224 = vpop.trf.xlu0
        %v1225 = vpop.trf.xlu0
        %v1226 = vpop.trf.xlu0
        %v1227 = vpop.trf.xlu0
        %v1228 = vpop.trf.xlu0
        %v1230 = vsel %vm935, %v1205, 0
        %v1233 = vsel %vm935, %v1206, 0
        %v1236 = vsel %vm935, %v1207, 0
        %v1239 = vsel %vm935, %v1208, 0
        %v1242 = vsel %vm935, %v1209, 0
        %v1245 = vsel %vm935, %v1210, 0
        %v1248 = vsel %vm935, %v1211, 0
        %v1251 = vsel %vm935, %v1212, 0
        %v1254 = vsel %vm935, %v1221, 0
        %v1257 = vsel %vm935, %v1222, 0
        %v1260 = vsel %vm935, %v1223, 0
        %v1263 = vsel %vm935, %v1224, 0
        %v1266 = vsel %vm935, %v1225, 0
        %v1269 = vsel %vm935, %v1226, 0
        %v1272 = vsel %vm935, %v1227, 0
        %v1275 = vsel %vm935, %v1228, 0
        %v1278 = vsel %vm638, %v999, 0
        %v1281 = vsel %vm638, %v1000, 0
        %1283 = vmatprep.subr.bf16.mxu0 0
        %1284 = vmatpush1.bf16.msra.mxu0 0
        %1285 = vmatprep.subr.bf16.mxu0 0
        %1286 = vmatpush1.bf16.msra.mxu0 0
        %1287 = vmatprep.subr.bf16.mxu0 0
        %1288 = vmatpush1.bf16.msra.mxu0 0
        %1289 = vmatprep.subr.bf16.mxu0 0
        %1290 = vmatpush1.bf16.msra.mxu0 0
        %1291 = vmatprep.subr.bf16.mxu0 0
        %1292 = vmatpush1.bf16.msra.mxu0 0
        %1293 = vmatprep.subr.bf16.mxu0 0
        %1294 = vmatpush1.bf16.msra.mxu0 0
        %1295 = vmatprep.subr.bf16.mxu0 0
        %1296 = vmatpush1.bf16.msra.mxu0 0
        %1297 = vmatprep.subr.bf16.mxu0 %v1281
        %1298 = vmatpush1.bf16.msra.mxu0 %v1278
        %1299 = vmatprep.subr.bf16.mxu0 0
        %1300 = vmatpush2.bf16.msra.mxu0 0
        %1301 = vmatprep.subr.bf16.mxu0 0
        %1302 = vmatpush2.bf16.msra.mxu0 0
        %1303 = vmatprep.subr.bf16.mxu0 0
        %1304 = vmatpush2.bf16.msra.mxu0 0
        %1305 = vmatprep.subr.bf16.mxu0 0
        %1306 = vmatpush2.bf16.msra.mxu0 0
        %1307 = vmatprep.subr.bf16.mxu0 0
        %1308 = vmatpush2.bf16.msra.mxu0 0
        %1309 = vmatprep.subr.bf16.mxu0 0
        %1310 = vmatpush2.bf16.msra.mxu0 0
        %1311 = vmatprep.subr.bf16.mxu0 0
        %1312 = vmatpush2.bf16.msra.mxu0 0
        %1313 = vmatprep.subr.bf16.mxu0 0
        %1314 = vmatpush2.bf16.msra.mxu0 0
        %1315 = vmatprep.mubr.bf16.mxu0 0
        %1316 = vmatmul.mubr.bf16.gmra.mxu0 %v1230
        %v1317 = vpop.f32.mrf.mxu0
        %v1318 = vadd.f32 %v1040, %v1317
        %v1319 = vpop.f32.mrf.mxu0
        %v1320 = vadd.f32 %v1040, %v1319
        %v1321 = vpop.f32.mrf.mxu0
        %v1322 = vadd.f32 %v1045, %v1321
        %v1323 = vpop.f32.mrf.mxu0
        %v1324 = vadd.f32 %v1045, %v1323
        %1325 = vmatprep.mubr.bf16.mxu0 0
        %1326 = vmatmul.mubr.bf16.gmra.mxu0 %v1233
        %v1327 = vpop.f32.mrf.mxu0
        %v1328 = vadd.f32 %v1050, %v1327
        %v1329 = vpop.f32.mrf.mxu0
        %v1330 = vadd.f32 %v1050, %v1329
        %v1331 = vpop.f32.mrf.mxu0
        %v1332 = vadd.f32 %v1055, %v1331
        %v1333 = vpop.f32.mrf.mxu0
        %v1334 = vadd.f32 %v1055, %v1333
        %1335 = vmatprep.mubr.bf16.mxu0 0
        %1336 = vmatmul.mubr.bf16.gmra.mxu0 %v1236
        %v1337 = vpop.f32.mrf.mxu0
        %v1338 = vadd.f32 %v1060, %v1337
        %v1339 = vpop.f32.mrf.mxu0
        %v1340 = vadd.f32 %v1060, %v1339
        %v1341 = vpop.f32.mrf.mxu0
        %v1342 = vadd.f32 %v1065, %v1341
        %v1343 = vpop.f32.mrf.mxu0
        %v1344 = vadd.f32 %v1065, %v1343
        %1345 = vmatprep.mubr.bf16.mxu0 0
        %1346 = vmatmul.mubr.bf16.gmra.mxu0 %v1239
        %v1347 = vpop.f32.mrf.mxu0
        %v1348 = vadd.f32 %v1070, %v1347
        %v1349 = vpop.f32.mrf.mxu0
        %v1350 = vadd.f32 %v1070, %v1349
        %v1351 = vpop.f32.mrf.mxu0
        %v1352 = vadd.f32 %v1075, %v1351
        %v1353 = vpop.f32.mrf.mxu0
        %v1354 = vadd.f32 %v1075, %v1353
        %1355 = vmatprep.mubr.bf16.mxu0 0
        %1356 = vmatmul.mubr.bf16.gmra.mxu0 %v1242
        %v1357 = vpop.f32.mrf.mxu0
        %v1358 = vadd.f32 %v1080, %v1357
        %v1359 = vpop.f32.mrf.mxu0
        %v1360 = vadd.f32 %v1080, %v1359
        %v1361 = vpop.f32.mrf.mxu0
        %v1362 = vadd.f32 %v1085, %v1361
        %v1363 = vpop.f32.mrf.mxu0
        %v1364 = vadd.f32 %v1085, %v1363
        %1365 = vmatprep.mubr.bf16.mxu0 0
        %1366 = vmatmul.mubr.bf16.gmra.mxu0 %v1245
        %v1367 = vpop.f32.mrf.mxu0
        %v1368 = vadd.f32 %v1090, %v1367
        %v1369 = vpop.f32.mrf.mxu0
        %v1370 = vadd.f32 %v1090, %v1369
        %v1371 = vpop.f32.mrf.mxu0
        %v1372 = vadd.f32 %v1095, %v1371
        %v1373 = vpop.f32.mrf.mxu0
        %v1374 = vadd.f32 %v1095, %v1373
        %1375 = vmatprep.mubr.bf16.mxu0 0
        %1376 = vmatmul.mubr.bf16.gmra.mxu0 %v1248
        %v1377 = vpop.f32.mrf.mxu0
        %v1378 = vadd.f32 %v1100, %v1377
        %v1379 = vpop.f32.mrf.mxu0
        %v1380 = vadd.f32 %v1100, %v1379
        %v1381 = vpop.f32.mrf.mxu0
        %v1382 = vadd.f32 %v1105, %v1381
        %v1383 = vpop.f32.mrf.mxu0
        %v1384 = vadd.f32 %v1105, %v1383
        %1385 = vmatprep.mubr.bf16.mxu0 0
        %1386 = vmatmul.mubr.bf16.gmra.mxu0 %v1251
        %v1387 = vpop.f32.mrf.mxu0
        %v1388 = vadd.f32 %v1110, %v1387
        %v1389 = vpop.f32.mrf.mxu0
        %v1390 = vadd.f32 %v1110, %v1389
        %v1391 = vpop.f32.mrf.mxu0
        %v1392 = vadd.f32 %v1115, %v1391
        %v1393 = vpop.f32.mrf.mxu0
        %v1394 = vadd.f32 %v1115, %v1393
        %1395 = vmatprep.mubr.bf16.mxu0 0
        %1396 = vmatmul.mubr.bf16.gmra.mxu0 %v1254
        %v1397 = vpop.f32.mrf.mxu0
        %v1398 = vadd.f32 %v1120, %v1397
        %v1399 = vpop.f32.mrf.mxu0
        %v1400 = vadd.f32 %v1120, %v1399
        %v1401 = vpop.f32.mrf.mxu0
        %v1402 = vadd.f32 %v1125, %v1401
        %v1403 = vpop.f32.mrf.mxu0
        %v1404 = vadd.f32 %v1125, %v1403
        %1405 = vmatprep.mubr.bf16.mxu0 0
        %1406 = vmatmul.mubr.bf16.gmra.mxu0 %v1257
        %v1407 = vpop.f32.mrf.mxu0
        %v1408 = vadd.f32 %v1130, %v1407
        %v1409 = vpop.f32.mrf.mxu0
        %v1410 = vadd.f32 %v1130, %v1409
        %v1411 = vpop.f32.mrf.mxu0
        %v1412 = vadd.f32 %v1135, %v1411
        %v1413 = vpop.f32.mrf.mxu0
        %v1414 = vadd.f32 %v1135, %v1413
        %1415 = vmatprep.mubr.bf16.mxu0 0
        %1416 = vmatmul.mubr.bf16.gmra.mxu0 %v1260
        %v1417 = vpop.f32.mrf.mxu0
        %v1418 = vadd.f32 %v1140, %v1417
        %v1419 = vpop.f32.mrf.mxu0
        %v1420 = vadd.f32 %v1140, %v1419
        %v1421 = vpop.f32.mrf.mxu0
        %v1422 = vadd.f32 %v1145, %v1421
        %v1423 = vpop.f32.mrf.mxu0
        %v1424 = vadd.f32 %v1145, %v1423
        %1425 = vmatprep.mubr.bf16.mxu0 0
        %1426 = vmatmul.mubr.bf16.gmra.mxu0 %v1263
        %v1427 = vpop.f32.mrf.mxu0
        %v1428 = vadd.f32 %v1150, %v1427
        %v1429 = vpop.f32.mrf.mxu0
        %v1430 = vadd.f32 %v1150, %v1429
        %v1431 = vpop.f32.mrf.mxu0
        %v1432 = vadd.f32 %v1155, %v1431
        %v1433 = vpop.f32.mrf.mxu0
        %v1434 = vadd.f32 %v1155, %v1433
        %1435 = vmatprep.mubr.bf16.mxu0 0
        %1436 = vmatmul.mubr.bf16.gmra.mxu0 %v1266
        %v1437 = vpop.f32.mrf.mxu0
        %v1438 = vadd.f32 %v1160, %v1437
        %v1439 = vpop.f32.mrf.mxu0
        %v1440 = vadd.f32 %v1160, %v1439
        %v1441 = vpop.f32.mrf.mxu0
        %v1442 = vadd.f32 %v1165, %v1441
        %v1443 = vpop.f32.mrf.mxu0
        %v1444 = vadd.f32 %v1165, %v1443
        %1445 = vmatprep.mubr.bf16.mxu0 0
        %1446 = vmatmul.mubr.bf16.gmra.mxu0 %v1269
        %v1447 = vpop.f32.mrf.mxu0
        %v1448 = vadd.f32 %v1170, %v1447
        %v1449 = vpop.f32.mrf.mxu0
        %v1450 = vadd.f32 %v1170, %v1449
        %v1451 = vpop.f32.mrf.mxu0
        %v1452 = vadd.f32 %v1175, %v1451
        %v1453 = vpop.f32.mrf.mxu0
        %v1454 = vadd.f32 %v1175, %v1453
        %1455 = vmatprep.mubr.bf16.mxu0 0
        %1456 = vmatmul.mubr.bf16.gmra.mxu0 %v1272
        %v1457 = vpop.f32.mrf.mxu0
        %v1458 = vadd.f32 %v1180, %v1457
        %v1459 = vpop.f32.mrf.mxu0
        %v1460 = vadd.f32 %v1180, %v1459
        %v1461 = vpop.f32.mrf.mxu0
        %v1462 = vadd.f32 %v1185, %v1461
        %v1463 = vpop.f32.mrf.mxu0
        %v1464 = vadd.f32 %v1185, %v1463
        %1465 = vmatprep.mubr.bf16.mxu0 0
        %1466 = vmatmul.mubr.bf16.gmra.mxu0 %v1275
        %v1467 = vpop.f32.mrf.mxu0
        %v1468 = vadd.f32 %v1190, %v1467
        %v1469 = vpop.f32.mrf.mxu0
        %v1470 = vadd.f32 %v1190, %v1469
        %v1471 = vpop.f32.mrf.mxu0
        %v1472 = vadd.f32 %v1195, %v1471
        %v1473 = vpop.f32.mrf.mxu0
        %v1474 = vadd.f32 %v1195, %v1473
        %1475 = vdwg.mxu0
        %v1476 = vmax.f32 %v1318, %v1328
        %v1477 = vmax.f32 %v1322, %v1332
        %v1478 = vmax.f32 %v1476, %v1338
        %v1479 = vmax.f32 %v1477, %v1342
        %v1480 = vmax.f32 %v1478, %v1348
        %v1481 = vmax.f32 %v1479, %v1352
        %v1482 = vmax.f32 %v1480, %v1358
        %v1483 = vmax.f32 %v1481, %v1362
        %v1484 = vmax.f32 %v1482, %v1368
        %v1485 = vmax.f32 %v1483, %v1372
        %v1486 = vmax.f32 %v1484, %v1378
        %v1487 = vmax.f32 %v1485, %v1382
        %v1488 = vmax.f32 %v1486, %v1388
        %v1489 = vmax.f32 %v1487, %v1392
        %v1490 = vmax.f32 %v1488, %v1398
        %v1491 = vmax.f32 %v1489, %v1402
        %v1492 = vmax.f32 %v1490, %v1408
        %v1493 = vmax.f32 %v1491, %v1412
        %v1494 = vmax.f32 %v1492, %v1418
        %v1495 = vmax.f32 %v1493, %v1422
        %v1496 = vmax.f32 %v1494, %v1428
        %v1497 = vmax.f32 %v1495, %v1432
        %v1498 = vmax.f32 %v1496, %v1438
        %v1499 = vmax.f32 %v1497, %v1442
        %v1500 = vmax.f32 %v1498, %v1448
        %v1501 = vmax.f32 %v1499, %v1452
        %v1502 = vmax.f32 %v1500, %v1458
        %v1503 = vmax.f32 %v1501, %v1462
        %v1504 = vmax.f32 %v1502, %v1468
        %v1505 = vmax.f32 %v1503, %v1472
        %v1506 = vmax.f32 %v1504, %v1505
        %v1507 = vrot.slane %v1506, 4
        %v1508 = vmax.f32 %v1506, %v1507
        %v1509 = vrot.slane %v1508, 2
        %v1510 = vmax.f32 %v1508, %v1509
        %v1511 = vrot.slane %v1510, 1
        %v1512 = vmax.f32 %v1510, %v1511
        %v1513 = vmax.f32 %v1320, %v1330
        %v1514 = vmax.f32 %v1324, %v1334
        %v1515 = vmax.f32 %v1513, %v1340
        %v1516 = vmax.f32 %v1514, %v1344
        %v1517 = vmax.f32 %v1515, %v1350
        %v1518 = vmax.f32 %v1516, %v1354
        %v1519 = vmax.f32 %v1517, %v1360
        %v1520 = vmax.f32 %v1518, %v1364
        %v1521 = vmax.f32 %v1519, %v1370
        %v1522 = vmax.f32 %v1520, %v1374
        %v1523 = vmax.f32 %v1521, %v1380
        %v1524 = vmax.f32 %v1522, %v1384
        %v1525 = vmax.f32 %v1523, %v1390
        %v1526 = vmax.f32 %v1524, %v1394
        %v1527 = vmax.f32 %v1525, %v1400
        %v1528 = vmax.f32 %v1526, %v1404
        %v1529 = vmax.f32 %v1527, %v1410
        %v1530 = vmax.f32 %v1528, %v1414
        %v1531 = vmax.f32 %v1529, %v1420
        %v1532 = vmax.f32 %v1530, %v1424
        %v1533 = vmax.f32 %v1531, %v1430
        %v1534 = vmax.f32 %v1532, %v1434
        %v1535 = vmax.f32 %v1533, %v1440
        %v1536 = vmax.f32 %v1534, %v1444
        %v1537 = vmax.f32 %v1535, %v1450
        %v1538 = vmax.f32 %v1536, %v1454
        %v1539 = vmax.f32 %v1537, %v1460
        %v1540 = vmax.f32 %v1538, %v1464
        %v1541 = vmax.f32 %v1539, %v1470
        %v1542 = vmax.f32 %v1540, %v1474
        %v1543 = vmax.f32 %v1541, %v1542
        %v1544 = vrot.slane %v1543, 4
        %v1545 = vmax.f32 %v1543, %v1544
        %v1546 = vrot.slane %v1545, 2
        %v1547 = vmax.f32 %v1545, %v1546
        %v1548 = vrot.slane %v1547, 1
        %v1549 = vmax.f32 %v1547, %v1548
        %v1550 = vsub.f32 %v1318, %v1512
        %v1551 = vsub.f32 %v1320, %v1549
        %v1552 = vsub.f32 %v1322, %v1512
        %v1553 = vsub.f32 %v1324, %v1549
        %v1554 = vsub.f32 %v1328, %v1512
        %v1555 = vsub.f32 %v1330, %v1549
        %v1556 = vsub.f32 %v1332, %v1512
        %v1557 = vsub.f32 %v1334, %v1549
        %v1558 = vsub.f32 %v1338, %v1512
        %v1559 = vsub.f32 %v1340, %v1549
        %v1560 = vsub.f32 %v1342, %v1512
        %v1561 = vsub.f32 %v1344, %v1549
        %v1562 = vsub.f32 %v1348, %v1512
        %v1563 = vsub.f32 %v1350, %v1549
        %v1564 = vsub.f32 %v1352, %v1512
        %v1565 = vsub.f32 %v1354, %v1549
        %v1566 = vsub.f32 %v1358, %v1512
        %v1567 = vsub.f32 %v1360, %v1549
        %v1568 = vsub.f32 %v1362, %v1512
        %v1569 = vsub.f32 %v1364, %v1549
        %v1570 = vsub.f32 %v1368, %v1512
        %v1571 = vsub.f32 %v1370, %v1549
        %v1572 = vsub.f32 %v1372, %v1512
        %v1573 = vsub.f32 %v1374, %v1549
        %v1574 = vsub.f32 %v1378, %v1512
        %v1575 = vsub.f32 %v1380, %v1549
        %v1576 = vsub.f32 %v1382, %v1512
        %v1577 = vsub.f32 %v1384, %v1549
        %v1578 = vsub.f32 %v1388, %v1512
        %v1579 = vsub.f32 %v1390, %v1549
        %v1580 = vsub.f32 %v1392, %v1512
        %v1581 = vsub.f32 %v1394, %v1549
        %v1582 = vsub.f32 %v1398, %v1512
        %v1583 = vsub.f32 %v1400, %v1549
        %v1584 = vsub.f32 %v1402, %v1512
        %v1585 = vsub.f32 %v1404, %v1549
        %v1586 = vsub.f32 %v1408, %v1512
        %v1587 = vsub.f32 %v1410, %v1549
        %v1588 = vsub.f32 %v1412, %v1512
        %v1589 = vsub.f32 %v1414, %v1549
        %v1590 = vsub.f32 %v1418, %v1512
        %v1591 = vsub.f32 %v1420, %v1549
        %v1592 = vsub.f32 %v1422, %v1512
        %v1593 = vsub.f32 %v1424, %v1549
        %v1594 = vsub.f32 %v1428, %v1512
        %v1595 = vsub.f32 %v1430, %v1549
        %v1596 = vsub.f32 %v1432, %v1512
        %v1597 = vsub.f32 %v1434, %v1549
        %v1598 = vsub.f32 %v1438, %v1512
        %v1599 = vsub.f32 %v1440, %v1549
        %v1600 = vsub.f32 %v1442, %v1512
        %v1601 = vsub.f32 %v1444, %v1549
        %v1602 = vsub.f32 %v1448, %v1512
        %v1603 = vsub.f32 %v1450, %v1549
        %v1604 = vsub.f32 %v1452, %v1512
        %v1605 = vsub.f32 %v1454, %v1549
        %v1606 = vsub.f32 %v1458, %v1512
        %v1607 = vsub.f32 %v1460, %v1549
        %v1608 = vsub.f32 %v1462, %v1512
        %v1609 = vsub.f32 %v1464, %v1549
        %v1610 = vsub.f32 %v1468, %v1512
        %v1611 = vsub.f32 %v1470, %v1549
        %v1612 = vsub.f32 %v1472, %v1512
        %v1613 = vsub.f32 %v1474, %v1549
        %v1614 = vmul.f32 %v1550, 1.442695
        %v1615 = vpow.pop %v1614
        %v1616 = vmul.f32 %v1551, 1.442695
        %v1617 = vpow.pop %v1616
        %v1618 = vmul.f32 %v1552, 1.442695
        %v1619 = vpow.pop %v1618
        %v1620 = vmul.f32 %v1553, 1.442695
        %v1621 = vpow.pop %v1620
        %v1622 = vmul.f32 %v1554, 1.442695
        %v1623 = vpow.pop %v1622
        %v1624 = vmul.f32 %v1555, 1.442695
        %v1625 = vpow.pop %v1624
        %v1626 = vmul.f32 %v1556, 1.442695
        %v1627 = vpow.pop %v1626
        %v1628 = vmul.f32 %v1557, 1.442695
        %v1629 = vpow.pop %v1628
        %v1630 = vmul.f32 %v1558, 1.442695
        %v1631 = vpow.pop %v1630
        %v1632 = vmul.f32 %v1559, 1.442695
        %v1633 = vpow.pop %v1632
        %v1634 = vmul.f32 %v1560, 1.442695
        %v1635 = vpow.pop %v1634
        %v1636 = vmul.f32 %v1561, 1.442695
        %v1637 = vpow.pop %v1636
        %v1638 = vmul.f32 %v1562, 1.442695
        %v1639 = vpow.pop %v1638
        %v1640 = vmul.f32 %v1563, 1.442695
        %v1641 = vpow.pop %v1640
        %v1642 = vmul.f32 %v1564, 1.442695
        %v1643 = vpow.pop %v1642
        %v1644 = vmul.f32 %v1565, 1.442695
        %v1645 = vpow.pop %v1644
        %v1646 = vmul.f32 %v1566, 1.442695
        %v1647 = vpow.pop %v1646
        %v1648 = vmul.f32 %v1567, 1.442695
        %v1649 = vpow.pop %v1648
        %v1650 = vmul.f32 %v1568, 1.442695
        %v1651 = vpow.pop %v1650
        %v1652 = vmul.f32 %v1569, 1.442695
        %v1653 = vpow.pop %v1652
        %v1654 = vmul.f32 %v1570, 1.442695
        %v1655 = vpow.pop %v1654
        %v1656 = vmul.f32 %v1571, 1.442695
        %v1657 = vpow.pop %v1656
        %v1658 = vmul.f32 %v1572, 1.442695
        %v1659 = vpow.pop %v1658
        %v1660 = vmul.f32 %v1573, 1.442695
        %v1661 = vpow.pop %v1660
        %v1662 = vmul.f32 %v1574, 1.442695
        %v1663 = vpow.pop %v1662
        %v1664 = vmul.f32 %v1575, 1.442695
        %v1665 = vpow.pop %v1664
        %v1666 = vmul.f32 %v1576, 1.442695
        %v1667 = vpow.pop %v1666
        %v1668 = vmul.f32 %v1577, 1.442695
        %v1669 = vpow.pop %v1668
        %v1670 = vmul.f32 %v1578, 1.442695
        %v1671 = vpow.pop %v1670
        %v1672 = vmul.f32 %v1579, 1.442695
        %v1673 = vpow.pop %v1672
        %v1674 = vmul.f32 %v1580, 1.442695
        %v1675 = vpow.pop %v1674
        %v1676 = vmul.f32 %v1581, 1.442695
        %v1677 = vpow.pop %v1676
        %v1678 = vmul.f32 %v1582, 1.442695
        %v1679 = vpow.pop %v1678
        %v1680 = vmul.f32 %v1583, 1.442695
        %v1681 = vpow.pop %v1680
        %v1682 = vmul.f32 %v1584, 1.442695
        %v1683 = vpow.pop %v1682
        %v1684 = vmul.f32 %v1585, 1.442695
        %v1685 = vpow.pop %v1684
        %v1686 = vmul.f32 %v1586, 1.442695
        %v1687 = vpow.pop %v1686
        %v1688 = vmul.f32 %v1587, 1.442695
        %v1689 = vpow.pop %v1688
        %v1690 = vmul.f32 %v1588, 1.442695
        %v1691 = vpow.pop %v1690
        %v1692 = vmul.f32 %v1589, 1.442695
        %v1693 = vpow.pop %v1692
        %v1694 = vmul.f32 %v1590, 1.442695
        %v1695 = vpow.pop %v1694
        %v1696 = vmul.f32 %v1591, 1.442695
        %v1697 = vpow.pop %v1696
        %v1698 = vmul.f32 %v1592, 1.442695
        %v1699 = vpow.pop %v1698
        %v1700 = vmul.f32 %v1593, 1.442695
        %v1701 = vpow.pop %v1700
        %v1702 = vmul.f32 %v1594, 1.442695
        %v1703 = vpow.pop %v1702
        %v1704 = vmul.f32 %v1595, 1.442695
        %v1705 = vpow.pop %v1704
        %v1706 = vmul.f32 %v1596, 1.442695
        %v1707 = vpow.pop %v1706
        %v1708 = vmul.f32 %v1597, 1.442695
        %v1709 = vpow.pop %v1708
        %v1710 = vmul.f32 %v1598, 1.442695
        %v1711 = vpow.pop %v1710
        %v1712 = vmul.f32 %v1599, 1.442695
        %v1713 = vpow.pop %v1712
        %v1714 = vmul.f32 %v1600, 1.442695
        %v1715 = vpow.pop %v1714
        %v1716 = vmul.f32 %v1601, 1.442695
        %v1717 = vpow.pop %v1716
        %v1718 = vmul.f32 %v1602, 1.442695
        %v1719 = vpow.pop %v1718
        %v1720 = vmul.f32 %v1603, 1.442695
        %v1721 = vpow.pop %v1720
        %v1722 = vmul.f32 %v1604, 1.442695
        %v1723 = vpow.pop %v1722
        %v1724 = vmul.f32 %v1605, 1.442695
        %v1725 = vpow.pop %v1724
        %v1726 = vmul.f32 %v1606, 1.442695
        %v1727 = vpow.pop %v1726
        %v1728 = vmul.f32 %v1607, 1.442695
        %v1729 = vpow.pop %v1728
        %v1730 = vmul.f32 %v1608, 1.442695
        %v1731 = vpow.pop %v1730
        %v1732 = vmul.f32 %v1609, 1.442695
        %v1733 = vpow.pop %v1732
        %v1734 = vmul.f32 %v1610, 1.442695
        %v1735 = vpow.pop %v1734
        %v1736 = vmul.f32 %v1611, 1.442695
        %v1737 = vpow.pop %v1736
        %v1738 = vmul.f32 %v1612, 1.442695
        %v1739 = vpow.pop %v1738
        %v1740 = vmul.f32 %v1613, 1.442695
        %v1741 = vpow.pop %v1740
        %v1742 = vadd.f32 %v1615, %v1619
        %v1743 = vadd.f32 %v1742, %v1623
        %v1744 = vadd.f32 %v1743, %v1627
        %v1745 = vadd.f32 %v1744, %v1631
        %v1746 = vadd.f32 %v1745, %v1635
        %v1747 = vadd.f32 %v1746, %v1639
        %v1748 = vadd.f32 %v1747, %v1643
        %v1749 = vadd.f32 %v1748, %v1647
        %v1750 = vadd.f32 %v1749, %v1651
        %v1751 = vadd.f32 %v1750, %v1655
        %v1752 = vadd.f32 %v1751, %v1659
        %v1753 = vadd.f32 %v1752, %v1663
        %v1754 = vadd.f32 %v1753, %v1667
        %v1755 = vadd.f32 %v1754, %v1671
        %v1756 = vadd.f32 %v1755, %v1675
        %v1757 = vadd.f32 %v1756, %v1679
        %v1758 = vadd.f32 %v1757, %v1683
        %v1759 = vadd.f32 %v1758, %v1687
        %v1760 = vadd.f32 %v1759, %v1691
        %v1761 = vadd.f32 %v1760, %v1695
        %v1762 = vadd.f32 %v1761, %v1699
        %v1763 = vadd.f32 %v1762, %v1703
        %v1764 = vadd.f32 %v1763, %v1707
        %v1765 = vadd.f32 %v1764, %v1711
        %v1766 = vadd.f32 %v1765, %v1715
        %v1767 = vadd.f32 %v1766, %v1719
        %v1768 = vadd.f32 %v1767, %v1723
        %v1769 = vadd.f32 %v1768, %v1727
        %v1770 = vadd.f32 %v1769, %v1731
        %v1771 = vadd.f32 %v1770, %v1735
        %v1772 = vadd.f32 %v1771, %v1739
        %v1773 = vrot.slane %v1772, 4
        %v1774 = vadd.f32 %v1772, %v1773
        %v1775 = vrot.slane %v1774, 2
        %v1776 = vadd.f32 %v1774, %v1775
        %v1777 = vrot.slane %v1776, 1
        %v1778 = vadd.f32 %v1776, %v1777
        %v1779 = vadd.f32 %v1617, %v1621
        %v1780 = vadd.f32 %v1779, %v1625
        %v1781 = vadd.f32 %v1780, %v1629
        %v1782 = vadd.f32 %v1781, %v1633
        %v1783 = vadd.f32 %v1782, %v1637
        %v1784 = vadd.f32 %v1783, %v1641
        %v1785 = vadd.f32 %v1784, %v1645
        %v1786 = vadd.f32 %v1785, %v1649
        %v1787 = vadd.f32 %v1786, %v1653
        %v1788 = vadd.f32 %v1787, %v1657
        %v1789 = vadd.f32 %v1788, %v1661
        %v1790 = vadd.f32 %v1789, %v1665
        %v1791 = vadd.f32 %v1790, %v1669
        %v1792 = vadd.f32 %v1791, %v1673
        %v1793 = vadd.f32 %v1792, %v1677
        %v1794 = vadd.f32 %v1793, %v1681
        %v1795 = vadd.f32 %v1794, %v1685
        %v1796 = vadd.f32 %v1795, %v1689
        %v1797 = vadd.f32 %v1796, %v1693
        %v1798 = vadd.f32 %v1797, %v1697
        %v1799 = vadd.f32 %v1798, %v1701
        %v1800 = vadd.f32 %v1799, %v1705
        %v1801 = vadd.f32 %v1800, %v1709
        %v1802 = vadd.f32 %v1801, %v1713
        %v1803 = vadd.f32 %v1802, %v1717
        %v1804 = vadd.f32 %v1803, %v1721
        %v1805 = vadd.f32 %v1804, %v1725
        %v1806 = vadd.f32 %v1805, %v1729
        %v1807 = vadd.f32 %v1806, %v1733
        %v1808 = vadd.f32 %v1807, %v1737
        %v1809 = vadd.f32 %v1808, %v1741
        %v1810 = vrot.slane %v1809, 4
        %v1811 = vadd.f32 %v1809, %v1810
        %v1812 = vrot.slane %v1811, 2
        %v1813 = vadd.f32 %v1811, %v1812
        %v1814 = vrot.slane %v1813, 1
        %v1815 = vadd.f32 %v1813, %v1814
        %v1816 = vrcp.pop %v1778
        %v1817 = vmul.f32 %v1615, %v1816
        %v1818 = vrcp.pop %v1815
        %v1819 = vmul.f32 %v1617, %v1818
        %v1820 = vmul.f32 %v1619, %v1816
        %v1821 = vmul.f32 %v1621, %v1818
        %v1822 = vmul.f32 %v1623, %v1816
        %v1823 = vmul.f32 %v1625, %v1818
        %v1824 = vmul.f32 %v1627, %v1816
        %v1825 = vmul.f32 %v1629, %v1818
        %v1826 = vmul.f32 %v1631, %v1816
        %v1827 = vmul.f32 %v1633, %v1818
        %v1828 = vmul.f32 %v1635, %v1816
        %v1829 = vmul.f32 %v1637, %v1818
        %v1830 = vmul.f32 %v1639, %v1816
        %v1831 = vmul.f32 %v1641, %v1818
        %v1832 = vmul.f32 %v1643, %v1816
        %v1833 = vmul.f32 %v1645, %v1818
        %v1834 = vmul.f32 %v1647, %v1816
        %v1835 = vmul.f32 %v1649, %v1818
        %v1836 = vmul.f32 %v1651, %v1816
        %v1837 = vmul.f32 %v1653, %v1818
        %v1838 = vmul.f32 %v1655, %v1816
        %v1839 = vmul.f32 %v1657, %v1818
        %v1840 = vmul.f32 %v1659, %v1816
        %v1841 = vmul.f32 %v1661, %v1818
        %v1842 = vmul.f32 %v1663, %v1816
        %v1843 = vmul.f32 %v1665, %v1818
        %v1844 = vmul.f32 %v1667, %v1816
        %v1845 = vmul.f32 %v1669, %v1818
        %v1846 = vmul.f32 %v1671, %v1816
        %v1847 = vmul.f32 %v1673, %v1818
        %v1848 = vmul.f32 %v1675, %v1816
        %v1849 = vmul.f32 %v1677, %v1818
        %v1850 = vmul.f32 %v1679, %v1816
        %v1851 = vmul.f32 %v1681, %v1818
        %v1852 = vmul.f32 %v1683, %v1816
        %v1853 = vmul.f32 %v1685, %v1818
        %v1854 = vmul.f32 %v1687, %v1816
        %v1855 = vmul.f32 %v1689, %v1818
        %v1856 = vmul.f32 %v1691, %v1816
        %v1857 = vmul.f32 %v1693, %v1818
        %v1858 = vmul.f32 %v1695, %v1816
        %v1859 = vmul.f32 %v1697, %v1818
        %v1860 = vmul.f32 %v1699, %v1816
        %v1861 = vmul.f32 %v1701, %v1818
        %v1862 = vmul.f32 %v1703, %v1816
        %v1863 = vmul.f32 %v1705, %v1818
        %v1864 = vmul.f32 %v1707, %v1816
        %v1865 = vmul.f32 %v1709, %v1818
        %v1866 = vmul.f32 %v1711, %v1816
        %v1867 = vmul.f32 %v1713, %v1818
        %v1868 = vmul.f32 %v1715, %v1816
        %v1869 = vmul.f32 %v1717, %v1818
        %v1870 = vmul.f32 %v1719, %v1816
        %v1871 = vmul.f32 %v1721, %v1818
        %v1872 = vmul.f32 %v1723, %v1816
        %v1873 = vmul.f32 %v1725, %v1818
        %v1874 = vmul.f32 %v1727, %v1816
        %v1875 = vmul.f32 %v1729, %v1818
        %v1876 = vmul.f32 %v1731, %v1816
        %v1877 = vmul.f32 %v1733, %v1818
        %v1878 = vmul.f32 %v1735, %v1816
        %v1879 = vmul.f32 %v1737, %v1818
        %v1880 = vmul.f32 %v1739, %v1816
        %v1881 = vmul.f32 %v1741, %v1818
        %v1882 = vpack.c.bf16 %v1820, %v1817
        %v1883 = vpack.c.bf16 %v1821, %v1819
        %v1884 = vpack.c.bf16 %v1824, %v1822
        %v1885 = vpack.c.bf16 %v1825, %v1823
        %v1886 = vpack.c.bf16 %v1828, %v1826
        %v1887 = vpack.c.bf16 %v1829, %v1827
        %v1888 = vpack.c.bf16 %v1832, %v1830
        %v1889 = vpack.c.bf16 %v1833, %v1831
        %v1890 = vpack.c.bf16 %v1836, %v1834
        %v1891 = vpack.c.bf16 %v1837, %v1835
        %v1892 = vpack.c.bf16 %v1840, %v1838
        %v1893 = vpack.c.bf16 %v1841, %v1839
        %v1894 = vpack.c.bf16 %v1844, %v1842
        %v1895 = vpack.c.bf16 %v1845, %v1843
        %v1896 = vpack.c.bf16 %v1848, %v1846
        %v1897 = vpack.c.bf16 %v1849, %v1847
        %v1898 = vpack.c.bf16 %v1852, %v1850
        %v1899 = vpack.c.bf16 %v1853, %v1851
        %v1900 = vpack.c.bf16 %v1856, %v1854
        %v1901 = vpack.c.bf16 %v1857, %v1855
        %v1902 = vpack.c.bf16 %v1860, %v1858
        %v1903 = vpack.c.bf16 %v1861, %v1859
        %v1904 = vpack.c.bf16 %v1864, %v1862
        %v1905 = vpack.c.bf16 %v1865, %v1863
        %v1906 = vpack.c.bf16 %v1868, %v1866
        %v1907 = vpack.c.bf16 %v1869, %v1867
        %v1908 = vpack.c.bf16 %v1872, %v1870
        %v1909 = vpack.c.bf16 %v1873, %v1871
        %v1910 = vpack.c.bf16 %v1876, %v1874
        %v1911 = vpack.c.bf16 %v1877, %v1875
        %v1912 = vpack.c.bf16 %v1880, %v1878
        %v1913 = vpack.c.bf16 %v1881, %v1879
        %1914 = vmatprep.subr.bf16.mxu0 %v1897
        %1915 = vmatpush1.bf16.msra.mxu0 %v1896
        %1916 = vmatprep.subr.bf16.mxu0 %v1895
        %1917 = vmatpush1.bf16.msra.mxu0 %v1894
        %1918 = vmatprep.subr.bf16.mxu0 %v1893
        %1919 = vmatpush1.bf16.msra.mxu0 %v1892
        %1920 = vmatprep.subr.bf16.mxu0 %v1891
        %1921 = vmatpush1.bf16.msra.mxu0 %v1890
        %1922 = vmatprep.subr.bf16.mxu0 %v1889
        %1923 = vmatpush1.bf16.msra.mxu0 %v1888
        %1924 = vmatprep.subr.bf16.mxu0 %v1887
        %1925 = vmatpush1.bf16.msra.mxu0 %v1886
        %1926 = vmatprep.subr.bf16.mxu0 %v1885
        %1927 = vmatpush1.bf16.msra.mxu0 %v1884
        %1928 = vmatprep.subr.bf16.mxu0 %v1883
        %1929 = vmatpush1.bf16.msra.mxu0 %v1882
        %1930 = vmatprep.subr.bf16.mxu0 %v1913
        %1931 = vmatpush2.bf16.msra.mxu0 %v1912
        %1932 = vmatprep.subr.bf16.mxu0 %v1911
        %1933 = vmatpush2.bf16.msra.mxu0 %v1910
        %1934 = vmatprep.subr.bf16.mxu0 %v1909
        %1935 = vmatpush2.bf16.msra.mxu0 %v1908
        %1936 = vmatprep.subr.bf16.mxu0 %v1907
        %1937 = vmatpush2.bf16.msra.mxu0 %v1906
        %1938 = vmatprep.subr.bf16.mxu0 %v1905
        %1939 = vmatpush2.bf16.msra.mxu0 %v1904
        %1940 = vmatprep.subr.bf16.mxu0 %v1903
        %1941 = vmatpush2.bf16.msra.mxu0 %v1902
        %1942 = vmatprep.subr.bf16.mxu0 %v1901
        %1943 = vmatpush2.bf16.msra.mxu0 %v1900
        %1944 = vmatprep.subr.bf16.mxu0 %v1899
        %1945 = vmatpush2.bf16.msra.mxu0 %v1898
        %1946 = vmatprep.mubr.bf16.mxu0 %v1004
        %1947 = vmatmul.mubr.bf16.gmra.mxu0 %v1003
        %v1948 = vpop.f32.mrf.mxu0
        %v1949 = vadd.f32 0.0, %v1948
        %v1950 = vpop.f32.mrf.mxu0
        %v1951 = vadd.f32 0.0, %v1950
        %v1952 = vpop.f32.mrf.mxu0
        %v1953 = vpop.f32.mrf.mxu0
        %1954 = vdwg.mxu0
        %v1955 = vld [vmem:[%s9] sm:$0xf]
        %v1956 = vpack.c.bf16 %v1949, %v1949
        %v1957 = vpack.c.bf16 %v1951, %v1951
        %v1958 = vld [vmem:[%s10] sm:$0xff]
        %1960 = vset.pattern.permute.xlu0 0
        %1961 = vperm.xlu0 %1960, %v1958
        %v1962 = vpop.permute.xlu0 %1961
        %v1965 = vsel %vm935, %v1955, 0
        %v1968 = vsel %vm638, %v1956, 0
        %v1971 = vsel %vm638, %v1957, 0
        %1973 = vmatprep.subr.bf16.mxu0 0
        %1974 = vmatpush1.bf16.msra.mxu0 0
        %1975 = vmatprep.subr.bf16.mxu0 0
        %1976 = vmatpush1.bf16.msra.mxu0 0
        %1977 = vmatprep.subr.bf16.mxu0 0
        %1978 = vmatpush1.bf16.msra.mxu0 0
        %1979 = vmatprep.subr.bf16.mxu0 0
        %1980 = vmatpush1.bf16.msra.mxu0 0
        %1981 = vmatprep.subr.bf16.mxu0 0
        %1982 = vmatpush1.bf16.msra.mxu0 0
        %1983 = vmatprep.subr.bf16.mxu0 0
        %1984 = vmatpush1.bf16.msra.mxu0 0
        %1985 = vmatprep.subr.bf16.mxu0 0
        %1986 = vmatpush1.bf16.msra.mxu0 0
        %1987 = vmatprep.subr.bf16.mxu0 %v1971
        %1988 = vmatpush1.bf16.msra.mxu0 %v1968
        %1989 = vmatprep.subr.bf16.mxu0 0
        %1990 = vmatpush2.bf16.msra.mxu0 0
        %1991 = vmatprep.subr.bf16.mxu0 0
        %1992 = vmatpush2.bf16.msra.mxu0 0
        %1993 = vmatprep.subr.bf16.mxu0 0
        %1994 = vmatpush2.bf16.msra.mxu0 0
        %1995 = vmatprep.subr.bf16.mxu0 0
        %1996 = vmatpush2.bf16.msra.mxu0 0
        %1997 = vmatprep.subr.bf16.mxu0 0
        %1998 = vmatpush2.bf16.msra.mxu0 0
        %1999 = vmatprep.subr.bf16.mxu0 0
        %2000 = vmatpush2.bf16.msra.mxu0 0
        %2001 = vmatprep.subr.bf16.mxu0 0
        %2002 = vmatpush2.bf16.msra.mxu0 0
        %2003 = vmatprep.subr.bf16.mxu0 0
        %2004 = vmatpush2.bf16.msra.mxu0 0
        %2005 = vmatprep.mubr.bf16.mxu0 0
        %2006 = vmatmul.mubr.bf16.gmra.mxu0 %v1965
        %v2007 = vpop.f32.mrf.mxu0
        %v2008 = vadd.f32 %v1962, %v2007
        %v2009 = vpop.f32.mrf.mxu0
        %v2010 = vadd.f32 %v1962, %v2009
        %v2011 = vpop.f32.mrf.mxu0
        %v2012 = vpop.f32.mrf.mxu0
        %2013 = vdwg.mxu0
        %v2014 = vadd.f32 %v2008, %v902
        %v2015 = vadd.f32 %v2010, %v903
        %2016 = vst [vmem:[%s533] sm:$0xff] %v2014
        %2017 = vst [vmem:[%s533 + $0x8] sm:$0xff] %v2015
        %2018 = vrot.lane.b32.xlu0 %v2014, 17
        %v2019 = vpop.permute.xlu0 %2018
        %2020 = vrot.lane.b32.xlu0 %v2015, 17
        %v2021 = vpop.permute.xlu0 %2020
        %v2022 = vsel %vm562, %v2019, %v2021
        %v2023 = vsel %vm562, %v2021, %v2019
        %2024 = vrot.lane.b32.xlu0 %v2014, 16
        %v2025 = vpop.permute.xlu0 %2024
        %2026 = vrot.lane.b32.xlu0 %v2015, 16
        %v2027 = vpop.permute.xlu0 %2026
        %v2028 = vsel %vm569, %v2025, %v2027
        %v2029 = vsel %vm569, %v2027, %v2025
        %2030 = vrot.lane.b32.xlu0 %v2014, 15
        %v2031 = vpop.permute.xlu0 %2030
        %2032 = vrot.lane.b32.xlu0 %v2015, 15
        %v2033 = vpop.permute.xlu0 %2032
        %v2034 = vsel %vm576, %v2031, %v2033
        %v2035 = vsel %vm576, %v2033, %v2031
        %2036 = vrot.lane.b32.xlu0 %v2014, 1
        %v2037 = vpop.permute.xlu0 %2036
        %2038 = vrot.lane.b32.xlu0 %v2015, 1
        %v2039 = vpop.permute.xlu0 %2038
        %v2040 = vsel %vm583, %v2037, %v2039
        %v2041 = vsel %vm583, %v2039, %v2037
        %2042 = vrot.lane.b32.xlu0 %v2014, 127
        %v2043 = vpop.permute.xlu0 %2042
        %2044 = vrot.lane.b32.xlu0 %v2015, 127
        %v2045 = vpop.permute.xlu0 %2044
        %v2046 = vsel %vm590, %v2043, %v2045
        %v2047 = vsel %vm590, %v2045, %v2043
        %2048 = vrot.lane.b32.xlu0 %v2014, 113
        %v2049 = vpop.permute.xlu0 %2048
        %2050 = vrot.lane.b32.xlu0 %v2015, 113
        %v2051 = vpop.permute.xlu0 %2050
        %v2052 = vsel %vm597, %v2049, %v2051
        %v2053 = vsel %vm597, %v2051, %v2049
        %2054 = vrot.lane.b32.xlu0 %v2014, 112
        %v2055 = vpop.permute.xlu0 %2054
        %2056 = vrot.lane.b32.xlu0 %v2015, 112
        %v2057 = vpop.permute.xlu0 %2056
        %v2058 = vsel %vm604, %v2055, %v2057
        %v2059 = vsel %vm604, %v2057, %v2055
        %2060 = vrot.lane.b32.xlu0 %v2014, 111
        %v2061 = vpop.permute.xlu0 %2060
        %2062 = vrot.lane.b32.xlu0 %v2015, 111
        %v2063 = vpop.permute.xlu0 %2062
        %v2064 = vsel %vm611, %v2061, %v2063
        %v2065 = vsel %vm611, %v2063, %v2061
        %v2066 = vld [vmem:[%s2] sm:$0xff]
        %v2067 = vld [vmem:[%s2 + $0x8] sm:$0xff]
        %v2068 = vld [vmem:[%s2 + $0x10] sm:$0xff]
        %v2069 = vld [vmem:[%s2 + $0x18] sm:$0xff]
        %v2070 = vld [vmem:[%s2 + $0x20] sm:$0xff]
        %v2071 = vld [vmem:[%s2 + $0x28] sm:$0xff]
        %v2072 = vld [vmem:[%s2 + $0x30] sm:$0xff]
        %v2073 = vld [vmem:[%s2 + $0x38] sm:$0xff]
        %v2074 = vld [vmem:[%s2 + $0x40] sm:$0xff]
        %v2075 = vld [vmem:[%s2 + $0x48] sm:$0xff]
        %v2076 = vld [vmem:[%s2 + $0x50] sm:$0xff]
        %v2077 = vld [vmem:[%s2 + $0x58] sm:$0xff]
        %v2078 = vld [vmem:[%s2 + $0x60] sm:$0xff]
        %v2079 = vld [vmem:[%s2 + $0x68] sm:$0xff]
        %v2080 = vld [vmem:[%s2 + $0x70] sm:$0xff]
        %v2081 = vld [vmem:[%s2 + $0x78] sm:$0xff]
        %v2082 = vld [vmem:[%s2 + $0x80] sm:$0xff]
        %v2083 = vld [vmem:[%s2 + $0x88] sm:$0xff]
        %v2084 = vmul.f32 %v2023, %v2066
        %v2085 = vmul.f32 %v2022, %v2067
        %v2086 = vmul.f32 %v2029, %v2068
        %v2087 = vmul.f32 %v2028, %v2069
        %v2088 = vmul.f32 %v2035, %v2070
        %v2089 = vmul.f32 %v2034, %v2071
        %v2090 = vmul.f32 %v2041, %v2072
        %v2091 = vmul.f32 %v2040, %v2073
        %v2092 = vmul.f32 %v2014, %v2074
        %v2093 = vmul.f32 %v2015, %v2075
        %v2094 = vmul.f32 %v2046, %v2076
        %v2095 = vmul.f32 %v2047, %v2077
        %v2096 = vmul.f32 %v2052, %v2078
        %v2097 = vmul.f32 %v2053, %v2079
        %v2098 = vmul.f32 %v2058, %v2080
        %v2099 = vmul.f32 %v2059, %v2081
        %v2100 = vmul.f32 %v2064, %v2082
        %v2101 = vmul.f32 %v2065, %v2083
        %v2102 = vpack.c.bf16 %v2086, %v2084
        %v2103 = vpack.c.bf16 %v2087, %v2085
        %v2104 = vpack.c.bf16 %v2090, %v2088
        %v2105 = vpack.c.bf16 %v2091, %v2089
        %v2106 = vpack.c.bf16 %v2094, %v2092
        %v2107 = vpack.c.bf16 %v2095, %v2093
        %v2108 = vpack.c.bf16 %v2098, %v2096
        %v2109 = vpack.c.bf16 %v2099, %v2097
        %v2110 = vpack.c.bf16 %v2100, %v2100
        %v2111 = vpack.c.bf16 %v2101, %v2101
        %v2112 = vld [vmem:[%s12] sm:$0xf]
        %v2113 = vld [vmem:[%s13] sm:$0xff]
        %2115 = vset.pattern.permute.xlu0 0
        %2116 = vperm.xlu0 %2115, %v2113
        %v2117 = vpop.permute.xlu0 %2116
        %v2120 = vsel %vm849, %v2112, 0
        %v2123 = vsel %vm638, %v2110, 0
        %v2126 = vsel %vm638, %v2111, 0
        %2128 = vmatprep.subr.bf16.mxu0 0
        %2129 = vmatpush1.bf16.msra.mxu0 0
        %2130 = vmatprep.subr.bf16.mxu0 0
        %2131 = vmatpush1.bf16.msra.mxu0 0
        %2132 = vmatprep.subr.bf16.mxu0 0
        %2133 = vmatpush1.bf16.msra.mxu0 0
        %2134 = vmatprep.subr.bf16.mxu0 %v2126
        %2135 = vmatpush1.bf16.msra.mxu0 %v2123
        %2136 = vmatprep.subr.bf16.mxu0 %v2109
        %2137 = vmatpush1.bf16.msra.mxu0 %v2108
        %2138 = vmatprep.subr.bf16.mxu0 %v2107
        %2139 = vmatpush1.bf16.msra.mxu0 %v2106
        %2140 = vmatprep.subr.bf16.mxu0 %v2105
        %2141 = vmatpush1.bf16.msra.mxu0 %v2104
        %2142 = vmatprep.subr.bf16.mxu0 %v2103
        %2143 = vmatpush1.bf16.msra.mxu0 %v2102
        %2144 = vmatprep.subr.bf16.mxu0 0
        %2145 = vmatpush2.bf16.msra.mxu0 0
        %2146 = vmatprep.subr.bf16.mxu0 0
        %2147 = vmatpush2.bf16.msra.mxu0 0
        %2148 = vmatprep.subr.bf16.mxu0 0
        %2149 = vmatpush2.bf16.msra.mxu0 0
        %2150 = vmatprep.subr.bf16.mxu0 0
        %2151 = vmatpush2.bf16.msra.mxu0 0
        %2152 = vmatprep.subr.bf16.mxu0 0
        %2153 = vmatpush2.bf16.msra.mxu0 0
        %2154 = vmatprep.subr.bf16.mxu0 0
        %2155 = vmatpush2.bf16.msra.mxu0 0
        %2156 = vmatprep.subr.bf16.mxu0 0
        %2157 = vmatpush2.bf16.msra.mxu0 0
        %2158 = vmatprep.subr.bf16.mxu0 0
        %2159 = vmatpush2.bf16.msra.mxu0 0
        %2160 = vmatprep.mubr.bf16.mxu0 0
        %2161 = vmatmul.mubr.bf16.gmra.mxu0 %v2120
        %v2162 = vpop.f32.mrf.mxu0
        %v2163 = vadd.f32 %v2117, %v2162
        %v2164 = vpop.f32.mrf.mxu0
        %v2165 = vadd.f32 %v2117, %v2164
        %v2166 = vpop.f32.mrf.mxu0
        %v2167 = vpop.f32.mrf.mxu0
        %2168 = vdwg.mxu0
        %v2169 = vld [vmem:[%s14] sm:$0xff]
        %v2170 = vld [vmem:[%s14 + $0x8] sm:$0xff]
        %v2171 = vld [vmem:[%s14 + $0x10] sm:$0xff]
        %v2172 = vld [vmem:[%s14 + $0x18] sm:$0xff]
        %v2173 = vld [vmem:[%s14 + $0x20] sm:$0xff]
        %v2174 = vld [vmem:[%s14 + $0x28] sm:$0xff]
        %v2175 = vld [vmem:[%s14 + $0x30] sm:$0xff]
        %v2176 = vld [vmem:[%s14 + $0x38] sm:$0xff]
        %v2177 = vld [vmem:[%s14 + $0x40] sm:$0xff]
        %v2178 = vld [vmem:[%s14 + $0x48] sm:$0xff]
        %v2179 = vld [vmem:[%s14 + $0x50] sm:$0xff]
        %v2180 = vld [vmem:[%s14 + $0x58] sm:$0xff]
        %v2181 = vld [vmem:[%s14 + $0x60] sm:$0xff]
        %v2182 = vld [vmem:[%s14 + $0x68] sm:$0xff]
        %v2183 = vld [vmem:[%s14 + $0x70] sm:$0xff]
        %v2184 = vld [vmem:[%s14 + $0x78] sm:$0xff]
        %v2185 = vld [vmem:[%s14 + $0x80] sm:$0xff]
        %v2186 = vld [vmem:[%s14 + $0x88] sm:$0xff]
        %v2187 = vld [vmem:[%s14 + $0x90] sm:$0xff]
        %v2188 = vld [vmem:[%s14 + $0x98] sm:$0xff]
        %v2189 = vld [vmem:[%s14 + $0xa0] sm:$0xff]
        %v2190 = vld [vmem:[%s14 + $0xa8] sm:$0xff]
        %v2191 = vld [vmem:[%s14 + $0xb0] sm:$0xff]
        %v2192 = vld [vmem:[%s14 + $0xb8] sm:$0xff]
        %v2193 = vld [vmem:[%s14 + $0xc0] sm:$0xff]
        %v2194 = vld [vmem:[%s14 + $0xc8] sm:$0xff]
        %v2195 = vld [vmem:[%s14 + $0xd0] sm:$0xff]
        %v2196 = vld [vmem:[%s14 + $0xd8] sm:$0xff]
        %v2197 = vld [vmem:[%s14 + $0xe0] sm:$0xff]
        %v2198 = vld [vmem:[%s14 + $0xe8] sm:$0xff]
        %v2199 = vld [vmem:[%s14 + $0xf0] sm:$0xff]
        %v2200 = vld [vmem:[%s14 + $0xf8] sm:$0xff]
        %2201 = vmatprep.subr.mxu0 0.0
        %2202 = vmatpush1.msra.mxu0 %v2184
        %2203 = vmatprep.subr.mxu0 0.0
        %2204 = vmatpush1.msra.mxu0 %v2183
        %2205 = vmatprep.subr.mxu0 0.0
        %2206 = vmatpush1.msra.mxu0 %v2182
        %2207 = vmatprep.subr.mxu0 0.0
        %2208 = vmatpush1.msra.mxu0 %v2181
        %2209 = vmatprep.subr.mxu0 0.0
        %2210 = vmatpush1.msra.mxu0 %v2180
        %2211 = vmatprep.subr.mxu0 0.0
        %2212 = vmatpush1.msra.mxu0 %v2179
        %2213 = vmatprep.subr.mxu0 0.0
        %2214 = vmatpush1.msra.mxu0 %v2178
        %2215 = vmatprep.subr.mxu0 0.0
        %2216 = vmatpush1.msra.mxu0 %v2177
        %2217 = vmatprep.subr.mxu0 0.0
        %2218 = vmatpush1.msra.mxu0 %v2176
        %2219 = vmatprep.subr.mxu0 0.0
        %2220 = vmatpush1.msra.mxu0 %v2175
        %2221 = vmatprep.subr.mxu0 0.0
        %2222 = vmatpush1.msra.mxu0 %v2174
        %2223 = vmatprep.subr.mxu0 0.0
        %2224 = vmatpush1.msra.mxu0 %v2173
        %2225 = vmatprep.subr.mxu0 0.0
        %2226 = vmatpush1.msra.mxu0 %v2172
        %2227 = vmatprep.subr.mxu0 0.0
        %2228 = vmatpush1.msra.mxu0 %v2171
        %2229 = vmatprep.subr.mxu0 0.0
        %2230 = vmatpush1.msra.mxu0 %v2170
        %2231 = vmatprep.subr.mxu0 0.0
        %2232 = vmatpush1.msra.mxu0 %v2169
        %2233 = vmatprep.subr.mxu0 0.0
        %2234 = vmatpush2.msra.mxu0 %v2200
        %2235 = vmatprep.subr.mxu0 0.0
        %2236 = vmatpush2.msra.mxu0 %v2199
        %2237 = vmatprep.subr.mxu0 0.0
        %2238 = vmatpush2.msra.mxu0 %v2198
        %2239 = vmatprep.subr.mxu0 0.0
        %2240 = vmatpush2.msra.mxu0 %v2197
        %2241 = vmatprep.subr.mxu0 0.0
        %2242 = vmatpush2.msra.mxu0 %v2196
        %2243 = vmatprep.subr.mxu0 0.0
        %2244 = vmatpush2.msra.mxu0 %v2195
        %2245 = vmatprep.subr.mxu0 0.0
        %2246 = vmatpush2.msra.mxu0 %v2194
        %2247 = vmatprep.subr.mxu0 0.0
        %2248 = vmatpush2.msra.mxu0 %v2193
        %2249 = vmatprep.subr.mxu0 0.0
        %2250 = vmatpush2.msra.mxu0 %v2192
        %2251 = vmatprep.subr.mxu0 0.0
        %2252 = vmatpush2.msra.mxu0 %v2191
        %2253 = vmatprep.subr.mxu0 0.0
        %2254 = vmatpush2.msra.mxu0 %v2190
        %2255 = vmatprep.subr.mxu0 0.0
        %2256 = vmatpush2.msra.mxu0 %v2189
        %2257 = vmatprep.subr.mxu0 0.0
        %2258 = vmatpush2.msra.mxu0 %v2188
        %2259 = vmatprep.subr.mxu0 0.0
        %2260 = vmatpush2.msra.mxu0 %v2187
        %2261 = vmatprep.subr.mxu0 0.0
        %2262 = vmatpush2.msra.mxu0 %v2186
        %2263 = vmatprep.subr.mxu0 0.0
        %2264 = vmatpush2.msra.mxu0 %v2185
        %2265 = vmatprep.mubr.f32.mxu0 %v2165
        %2266 = vmatmul.mubr.f32.gmra.mxu0 %v2163
        %v2267 = vpop.f32.mrf.mxu0
        %v2268 = vadd.f32 0.0, %v2267
        %v2269 = vpop.f32.mrf.mxu0
        %2270 = vdwg.mxu0
        %vm2271 = vcmask 523264
        %2272 = vst.msk [vmem:[%s540] sm:$0xff] %vm2271, %v2268
        %s2273 = sand.u32 %s367, 1
        %s2274 = scalar_lea.sflag [#allocation3], %s2273
        %s2275 = sand.u32 %s367, 1
        %s2276 = smul.addr %s2275, 16
        %s2277 = scalar_lea.vmem [#allocation2], %s2276
        %s2278 = sand.u32 %s393, 1
        %s2279 = scalar_lea.sflag [#allocation5], %s2278
        %s2280 = sand.u32 %s393, 1
        %s2281 = smul.addr %s2280, 8
        %s2282 = scalar_lea.vmem [#allocation4], %s2281
        // Predicated region
        $region81: #{tpu_custom_call.1} parent=79 // pred_check
          %p2283 = pneg %p377
        $region82: #{tpu_custom_call.1} parent=79 // pred_check_branch
          %2285 = sbr.rel (%p2283) target = $region84
        $region83: #{tpu_custom_call.1} parent=79 // pred_region
          %s2287 = ssub.s32 256, 256
          %2288 = vsyncadd %s2274, %s2287
          %s2289 = smul.addr %s34, 2
          %s2290 = smul.addr %s2289, 128
          %s2291 = scalar_lea.hbm %s15, %s2290
          %s2293 = sshll.u32 %s2277, 4
          %s2294 = int_to_ptr.vmem [resolvable:$true] %s2293
          %2296 = dma.vmem_to_hbm [thread:$0]  %s2294, 256, %s2291, %s2274
        $region84: #{tpu_custom_call.1} parent=79 // pred_fallthru
          _
        // Predicated region
        $region85: #{tpu_custom_call.1} parent=79 // pred_check
          %p2297 = pneg %p403
        $region86: #{tpu_custom_call.1} parent=79 // pred_check_branch
          %2299 = sbr.rel (%p2297) target = $region88
        $region87: #{tpu_custom_call.1} parent=79 // pred_region
          %s2301 = ssub.s32 128, 128
          %2302 = vsyncadd %s2279, %s2301
          %s2303 = smul.addr %s34, 128
          %s2304 = scalar_lea.hbm %s16, %s2303
          %s2306 = sshll.u32 %s2282, 4
          %s2307 = int_to_ptr.vmem [resolvable:$true] %s2306
          %2309 = dma.vmem_to_hbm [thread:$0]  %s2307, 128, %s2304, %s2279
        $region88: #{tpu_custom_call.1} parent=79 // pred_fallthru
          _
      $region80: #{tpu_custom_call.1} parent=5 // pred_fallthru
        _
      %p2310 = scmp.le.s32.totalorder 2, %s29
      // Predicated region
      $region89: #{tpu_custom_call.1} parent=5 // pred_check
        %p2311 = pneg %p2310
      $region90: #{tpu_custom_call.1} parent=5 // pred_check_branch
        %2313 = sbr.rel (%p2311) target = $region92
      $region91: #{tpu_custom_call.1} parent=5 // pred_region
        %s2314 = ssub.s32 %s29, 2
        // Predicated region
        $region93: #{tpu_custom_call.1} parent=91 // pred_check
          %p2315 = pneg %p383
        $region94: #{tpu_custom_call.1} parent=91 // pred_check_branch
          %2317 = sbr.rel (%p2315) target = $region96
        $region95: #{tpu_custom_call.1} parent=91 // pred_region
          %s2318 = sand.u32 %s368, 1
          %s2319 = scalar_lea.sflag [#allocation3], %s2318
          %s2320 = sand.u32 %s368, 1
          %s2321 = smul.addr %s2320, 16
          %s2322 = scalar_lea.vmem [#allocation2], %s2321
          %2323 = dma.done %s2319, 256
        $region96: #{tpu_custom_call.1} parent=91 // pred_fallthru
          _
        // Predicated region
        $region97: #{tpu_custom_call.1} parent=91 // pred_check
          %p2324 = pneg %p409
        $region98: #{tpu_custom_call.1} parent=91 // pred_check_branch
          %2326 = sbr.rel (%p2324) target = $region100
        $region99: #{tpu_custom_call.1} parent=91 // pred_region
          %s2327 = sand.u32 %s394, 1
          %s2328 = scalar_lea.sflag [#allocation5], %s2327
          %s2329 = sand.u32 %s394, 1
          %s2330 = smul.addr %s2329, 8
          %s2331 = scalar_lea.vmem [#allocation4], %s2330
          %2332 = dma.done %s2328, 128
        $region100: #{tpu_custom_call.1} parent=91 // pred_fallthru
          _
      $region92: #{tpu_custom_call.1} parent=5 // pred_fallthru
        _
    $region6: #{tpu_custom_call.1} parent=1 // loop_footer
      %s33 = sadd.s32 1, %s29
    $region7: #{tpu_custom_call.1} parent=1 // loop_footer_branch
      %28 = sbr.rel target = $region3
    $region8: #{tpu_custom_call.1} parent=1 // loop_exit
      _
    %2333 = vsyncpa [#allocation3], 1
    %s2334 = scalar_lea.sflag [#allocation3], 1
    %2335 = vsyncpa %s2334, 1
    %2336 = vsyncpa [#allocation5], 1
    %s2337 = scalar_lea.sflag [#allocation5], 1
    %2338 = vsyncpa %s2337, 1

</llo_original>
